<compile_context>
chip_gen: v7x
topology: tpu7x:2x2x1
jax: 0.10.0
libtpu: 0.0.40
codegen_flags: <defaults>
</compile_context>

<pallas_src>
import functools
import math

import jax
import jax.numpy as jnp
from jax.experimental import pallas as pl
from jax.experimental.pallas import tpu as pltpu

# ----------------------------------------------------------------------------
# Scaled-down model hyper-parameters (structure identical to the PyTorch module)
# ----------------------------------------------------------------------------
BASE = 8                                  # PyTorch ResNet-50: 64
EXPANSION = 4
LAYER_PLANES = [BASE, BASE * 2, BASE * 4, BASE * 8]      # -> out channels [32, 64, 128, 256]
LAYER_BLOCKS = [3, 4, 6, 3]
LAYER_STRIDES = [1, 2, 2, 2]
LAYER_DILATIONS = [1, 1, 2, 4]            # variant 'D': layer3 conv2 dil=2, layer4 conv2 dil=4
FPN_DIM = 32                              # PyTorch: 256
NUM_CLASSES = 5
BN_EPS = 1e-5

_PALLAS_MIN_M = 32     # below this the GEMM is pallas_call-overhead bound -> plain XLA
_PALLAS_MIN_N = 8      # Cout < 8 (flow conv=2, cls=5) -> narrow masked lane stores -> plain XLA


# ----------------------------------------------------------------------------
# Pallas kernels
# ----------------------------------------------------------------------------
def _mm_affine_kernel(a_ref, b_ref, aff_ref, o_ref, *, relu):
    acc = jnp.dot(a_ref[...], b_ref[...], preferred_element_type=jnp.float32)
    out = acc * aff_ref[0:1, :] + aff_ref[1:2, :]
    if relu:
        out = jnp.maximum(out, 0.0)
    o_ref[...] = out.astype(o_ref.dtype)


def _mm_affine_res_kernel(a_ref, b_ref, aff_ref, r_ref, o_ref, *, relu):
    acc = jnp.dot(a_ref[...], b_ref[...], preferred_element_type=jnp.float32)
    out = acc * aff_ref[0:1, :] + aff_ref[1:2, :] + r_ref[...].astype(jnp.float32)
    if relu:
        out = jnp.maximum(out, 0.0)
    o_ref[...] = out.astype(o_ref.dtype)


def _conv_tap_kernel(x_ref, w_ref, aff_ref, o_ref, *, taps, tm, relu):
    """Fused-im2col tap GEMM: for each static tap offset, read a shifted row window of the
    resident padded activation slab and accumulate its tap GEMM in f32."""
    acc = None
    for t, delta in enumerate(taps):                      # static Python loop (kh*kw taps)
        a = x_ref[pl.ds(delta, tm), :]                    # static slice: zero relayout risk
        c = jnp.dot(a, w_ref[t], preferred_element_type=jnp.float32)
        acc = c if acc is None else acc + c
    out = acc * aff_ref[0:1, :] + aff_ref[1:2, :]
    if relu:
        out = jnp.maximum(out, 0.0)
    o_ref[...] = out.astype(o_ref.dtype)


def _pick_tm(M):
    """Only split M when every block is substantial (tiny-GEMM splits are pure overhead);
    big-M layers get TM=512 (mem-bound tile sweep: 512 ~ 85% of HBM roofline)."""
    if M >= 1024:
        return 512
    return M


@functools.partial(jax.jit, static_argnames=("relu",))
def matmul_affine(a, b, affine, residual=None, *, relu=False):
    """(M,K)bf16 @ (K,Cout)bf16 -> f32 acc -> per-column affine (+bf16 residual) (+ReLU),
    stored as bf16.  Weight / affine blocks are resident; A/out are tiled along M only when
    M >= 1024, so there are no partial-tile overhangs at these shapes."""
    M, K = a.shape
    Ncol = b.shape[1]
    has_res = residual is not None
    TM = _pick_tm(M)
    nblk = pl.cdiv(M, TM)

    in_specs = [
        pl.BlockSpec((TM, K), lambda i: (i, 0)),          # A tile (bf16)
        pl.BlockSpec((K, Ncol), lambda i: (0, 0)),        # full weight, resident (bf16)
        pl.BlockSpec((2, Ncol), lambda i: (0, 0)),        # packed scale/shift (f32)
    ]
    args = [a, b, affine]
    if has_res:
        in_specs.append(pl.BlockSpec((TM, Ncol), lambda i: (i, 0)))   # residual (bf16)
        args.append(residual)
        kernel = functools.partial(_mm_affine_res_kernel, relu=relu)
    else:
        kernel = functools.partial(_mm_affine_kernel, relu=relu)

    bytes_accessed = int(2 * (M * K + K * Ncol + M * Ncol) + 8 * Ncol
                         + (2 * M * Ncol if has_res else 0))
    cost = pl.CostEstimate(flops=int(2 * M * K * Ncol), transcendentals=0,
                           bytes_accessed=bytes_accessed)
    blk_bytes = int(2 * (2 * TM * K + K * Ncol + 2 * TM * Ncol) + 8 * Ncol
                    + (4 * TM * Ncol if has_res else 0))
    vmem_limit = int(min(32 * 1024 * 1024, max(4 * 1024 * 1024, 2 * blk_bytes + (1 << 20))))

    return pl.pallas_call(
        kernel,
        out_shape=jax.ShapeDtypeStruct((M, Ncol), jnp.bfloat16),
        grid=(nblk,),
        in_specs=in_specs,
        out_specs=pl.BlockSpec((TM, Ncol), lambda i: (i, 0)),
        compiler_params=pltpu.CompilerParams(
            dimension_semantics=("parallel",),
            vmem_limit_bytes=vmem_limit),
        cost_estimate=cost,
    )(*args)


@functools.partial(jax.jit, static_argnames=("taps", "relu"))
def conv_tap_gemm(x2d, w_taps, affine, *, taps, relu=False):
    """Fused-im2col stride-1 conv.  x2d = padded NHWC slab flattened to (N*Hp*Wp, C) bf16;
    w_taps = (kh*kw, C, Cout) bf16; affine = (2, Cout) f32.  Returns (N*Hp*Wp, Cout) bf16
    computed at padded resolution (valid region is sliced out by the caller)."""
    Mout, C = x2d.shape
    T, _, Cout = w_taps.shape
    TM = Mout                             # single full-dim block (M <= ~650 at these widths)
    # Tail rows read by the largest tap offset must exist (zero rows -> garbage only lands in
    # the invalid padded-border output rows, which the caller slices away).
    need = TM + max(taps)
    if need > Mout:
        x2d = jnp.pad(x2d, ((0, need - Mout), (0, 0)))
    Mext = x2d.shape[0]

    x_bytes = Mext * C * 2
    w_bytes = T * C * Cout * 2
    o_bytes = Mout * Cout * 2
    cost = pl.CostEstimate(flops=int(2 * Mout * C * Cout * T), transcendentals=0,
                           bytes_accessed=int(x_bytes + w_bytes + o_bytes + 8 * Cout))
    vmem_limit = int(min(32 * 1024 * 1024,
                         max(4 * 1024 * 1024, x_bytes + w_bytes + 4 * o_bytes + (2 << 20))))

    return pl.pallas_call(
        functools.partial(_conv_tap_kernel, taps=taps, tm=TM, relu=relu),
        out_shape=jax.ShapeDtypeStruct((Mout, Cout), jnp.bfloat16),
        grid=(1,),
        in_specs=[
            pl.BlockSpec((Mext, C), lambda i: (0, 0)),        # resident padded activations
            pl.BlockSpec((T, C, Cout), lambda i: (0, 0, 0)),  # per-tap weights, resident
            pl.BlockSpec((2, Cout), lambda i: (0, 0)),        # packed scale/shift
        ],
        out_specs=pl.BlockSpec((TM, Cout), lambda i: (i, 0)),
        compiler_params=pltpu.CompilerParams(
            dimension_semantics=("arbitrary",),
            vmem_limit_bytes=vmem_limit),
        cost_estimate=cost,
    )(x2d, w_taps, affine)


# ----------------------------------------------------------------------------
# Conv dispatch: 1x1 reshape / fused-tap Pallas / im2col Pallas / plain-XLA fallback
# ----------------------------------------------------------------------------
def _im2col(x, kh, kw, stride, padding, dilation):
    N, H, W, C = x.shape
    if padding > 0:
        x = jnp.pad(x, ((0, 0), (padding, padding), (padding, padding), (0, 0)))
    Hp, Wp = H + 2 * padding, W + 2 * padding
    eff_h = dilation * (kh - 1) + 1
    eff_w = dilation * (kw - 1) + 1
    oh = (Hp - eff_h) // stride + 1
    ow = (Wp - eff_w) // stride + 1
    patches = []
    for i in range(kh):
        for j in range(kw):
            hs, ws = i * dilation, j * dilation
            patches.append(
                x[:, hs:hs + stride * (oh - 1) + 1:stride,
                     ws:ws + stride * (ow - 1) + 1:stride, :])
    cols = patches[0] if len(patches) == 1 else jnp.concatenate(patches, axis=-1)
    return cols.reshape(N * oh * ow, kh * kw * C), oh, ow


def _dense_affine(cols, fp, res2, relu):
    """Plain-XLA fallback for degenerate GEMMs (fused by XLA with neighbouring glue)."""
    out = jnp.dot(cols, fp["wmat"], preferred_element_type=jnp.float32)
    out = out * fp["affine"][0:1, :] + fp["affine"][1:2, :]
    if res2 is not None:
        out = out + res2.astype(jnp.float32)
    if relu:
        out = jnp.maximum(out, 0.0)
    return out.astype(jnp.bfloat16)


def conv_apply(x, fp, *, stride=1, padding=0, dilation=1, relu=False, residual=None):
    """Conv2d (pre-folded weight) + eval-BN affine + optional residual + optional ReLU.
    Outputs bf16 NHWC."""
    kh, kw = fp["kh"], fp["kw"]
    N, H, W, _ = x.shape
    cout = fp["wmat"].shape[1]
    xb = x.astype(jnp.bfloat16)          # no-op when the producing layer already emitted bf16

    eff_h = dilation * (kh - 1) + 1
    eff_w = dilation * (kw - 1) + 1
    oh = (H + 2 * padding - eff_h) // stride + 1
    ow = (W + 2 * padding - eff_w) // stride + 1
    M = N * oh * ow
    use_pallas = (M >= _PALLAS_MIN_M) and (cout >= _PALLAS_MIN_N)

    res2 = None
    if residual is not None:
        res2 = residual.astype(jnp.bfloat16).reshape(M, cout)

    if kh == 1 and kw == 1 and padding == 0:
        xs = xb[:, ::stride, ::stride, :] if stride > 1 else xb
        cols = xs.reshape(M, xs.shape[3])                       # 1x1 conv: no im2col at all
    elif use_pallas and stride == 1 and residual is None:
        # Fused im2col: tap-offset GEMM on the padded NHWC slab (no kh*kw duplication).
        if padding > 0:
            xp = jnp.pad(xb, ((0, 0), (padding, padding), (padding, padding), (0, 0)))
        else:
            xp = xb
        Hp, Wp = H + 2 * padding, W + 2 * padding
        taps = tuple(i * dilation * Wp + j * dilation
                     for i in range(kh) for j in range(kw))
        y = conv_tap_gemm(xp.reshape(N * Hp * Wp, xp.shape[3]),
                          fp["wtaps"], fp["affine"], taps=taps, relu=relu)
        return y.reshape(N, Hp, Wp, cout)[:, :oh, :ow, :]
    else:
        # Strided KxK (stem 7x7 s2 + first conv2 of layers 2-4) or degenerate fallback.
        cols, oh, ow = _im2col(xb, kh, kw, stride, padding, dilation)

    if use_pallas:
        out = matmul_affine(cols, fp["wmat"], fp["affine"], res2, relu=relu)
    else:
        out = _dense_affine(cols, fp, res2, relu)
    return out.reshape(N, oh, ow, cout)


# ----------------------------------------------------------------------------
# JAX glue ops (no clean Pallas equivalent at these sizes)
# ----------------------------------------------------------------------------
def maxpool_3x3_s2_p1(x):
    neg = jnp.array(-jnp.inf, dtype=x.dtype)
    return jax.lax.reduce_window(
        x, neg, jax.lax.max,
        window_dimensions=(1, 3, 3, 1), window_strides=(1, 2, 2, 1),
        padding=((0, 0), (1, 1), (1, 1), (0, 0)))


def upsample_bilinear_ac(x, out_h, out_w):
    """F.interpolate(..., mode='bilinear', align_corners=True) on NHWC."""
    N, H, W, C = x.shape
    if H == out_h and W == out_w:
        return x
    ys = jnp.linspace(0.0, H - 1.0, out_h)
    xs = jnp.linspace(0.0, W - 1.0, out_w)
    y0 = jnp.floor(ys).astype(jnp.int32)
    y1 = jnp.minimum(y0 + 1, H - 1)
    wy = (ys - y0)[None, :, None, None]
    x0 = jnp.floor(xs).astype(jnp.int32)
    x1 = jnp.minimum(x0 + 1, W - 1)
    wx = (xs - x0)[None, None, :, None]

    def interp_cols(rows):
        return rows[:, :, x0] * (1.0 - wx) + rows[:, :, x1] * wx

    top = interp_cols(x[:, y0])
    bot = interp_cols(x[:, y1])
    return top * (1.0 - wy) + bot * wy


def grid_sample_bilinear(x, grid):
    """torch.nn.functional.grid_sample (bilinear, zeros padding, align_corners=False), NHWC."""
    N, H, W, C = x.shape
    gx, gy = grid[..., 0], grid[..., 1]
    ix = ((gx + 1.0) * W - 1.0) * 0.5
    iy = ((gy + 1.0) * H - 1.0) * 0.5
    x0 = jnp.floor(ix).astype(jnp.int32)
    y0 = jnp.floor(iy).astype(jnp.int32)
    x1, y1 = x0 + 1, y0 + 1
    wx1, wy1 = ix - x0, iy - y0
    wx0, wy0 = 1.0 - wx1, 1.0 - wy1

    def gather(img, yy, xx):
        yc = jnp.clip(yy, 0, H - 1)
        xc = jnp.clip(xx, 0, W - 1)
        vals = img[yc, xc]
        valid = ((yy >= 0) & (yy <= H - 1) & (xx >= 0) & (xx <= W - 1)).astype(img.dtype)
        return vals * valid[..., None]

    def per_batch(img, y0b, y1b, x0b, x1b, w00, w01, w10, w11):
        return (gather(img, y0b, x0b) * w00[..., None] +
                gather(img, y0b, x1b) * w01[..., None] +
                gather(img, y1b, x0b) * w10[..., None] +
                gather(img, y1b, x1b) * w11[..., None])

    return jax.vmap(per_batch)(x, y0, y1, x0, x1,
                               wy0 * wx0, wy0 * wx1, wy1 * wx0, wy1 * wx1)


# ----------------------------------------------------------------------------
# Deterministic parameter construction (folded once at build time: bf16 weight matrices,
# per-tap bf16 weights, packed (2,Cout) f32 affine).
# ----------------------------------------------------------------------------
class ParamGen:
    def __init__(self, seed=0):
        self._key = jax.random.PRNGKey(seed)

    def key(self):
        self._key, k = jax.random.split(self._key)
        return k

    def conv(self, cout, cin, kh, kw):
        fan_in = cin * kh * kw
        return jax.random.normal(self.key(), (cout, cin, kh, kw), jnp.float32) / math.sqrt(fan_in)

    def bias(self, c):
        return 0.01 * jax.random.normal(self.key(), (c,), jnp.float32)

    def bn(self, c):
        return dict(
            gamma=1.0 + 0.1 * jax.random.normal(self.key(), (c,), jnp.float32),
            beta=0.05 * jax.random.normal(self.key(), (c,), jnp.float32),
            mean=0.05 * jax.random.normal(self.key(), (c,), jnp.float32),
            var=jax.random.uniform(self.key(), (c,), jnp.float32, 0.5, 1.5),
        )


def fold_conv(g, cout, cin, kh, kw, *, bn=True, bias=False):
    """Generate a conv (+optional bias / eval-BN) and pre-fold it into matmul-ready tensors."""
    w = g.conv(cout, cin, kh, kw)
    b = g.bias(cout) if bias else None
    if bn:
        p = g.bn(cout)
        scale = p["gamma"] / jnp.sqrt(p["var"] + BN_EPS)
        shift = p["beta"] - p["mean"] * scale
        if b is not None:
            shift = shift + b * scale
    else:
        scale = jnp.ones((cout,), jnp.float32)
        shift = b if b is not None else jnp.zeros((cout,), jnp.float32)
    whwio = jnp.transpose(w, (2, 3, 1, 0))                     # (kh, kw, cin, cout)
    wmat = whwio.reshape(kh * kw * cin, cout).astype(jnp.bfloat16)
    wtaps = whwio.reshape(kh * kw, cin, cout).astype(jnp.bfloat16)
    affine = jnp.stack([scale, shift]).astype(jnp.float32)     # (2, cout): row0=scale row1=shift
    return dict(wmat=wmat, wtaps=wtaps, affine=affine, kh=kh, kw=kw)


def build_params():
    g = ParamGen(0)
    P = {}
    # layer0: conv1(7x7,s2) + bn + relu + maxpool
    P["stem"] = fold_conv(g, BASE, 3, 7, 7)

    # ResNet-50 bottleneck stack (variant 'D' dilations on conv2 of layer3/layer4)
    cin = BASE
    for li, (planes, blocks, stride, dil) in enumerate(
            zip(LAYER_PLANES, LAYER_BLOCKS, LAYER_STRIDES, LAYER_DILATIONS), start=1):
        layer = []
        for b in range(blocks):
            s = stride if b == 0 else 1
            blk = dict(
                conv1=fold_conv(g, planes, cin, 1, 1),
                conv2=fold_conv(g, planes, planes, 3, 3),
                conv3=fold_conv(g, planes * EXPANSION, planes, 1, 1),
                stride=s, dilation=dil,
            )
            if b == 0:
                blk["down"] = fold_conv(g, planes * EXPANSION, cin, 1, 1)
            layer.append(blk)
            cin = planes * EXPANSION
        P[f"layer{li}"] = layer

    def coord_att_params(c, reduction=32):
        mip = max(8, c // reduction)
        return dict(conv1=fold_conv(g, mip, c, 1, 1, bn=True, bias=True),
                    conv_h=fold_conv(g, c, mip, 1, 1, bn=False, bias=True),
                    conv_w=fold_conv(g, c, mip, 1, 1, bn=False, bias=True))

    c3 = LAYER_PLANES[2] * EXPANSION
    c4 = LAYER_PLANES[3] * EXPANSION
    P["ca3"] = coord_att_params(c3)
    P["ca4"] = coord_att_params(c4)

    # --- head (UperNetAlignHead) ---
    fpn_inplanes = [p * EXPANSION for p in LAYER_PLANES]          # [32, 64, 128, 256]
    aspp_in = fpn_inplanes[-1]
    P["aspp"] = dict(
        b1=fold_conv(g, FPN_DIM, aspp_in, 1, 1),
        b2=fold_conv(g, FPN_DIM, aspp_in, 3, 3),
        b3=fold_conv(g, FPN_DIM, aspp_in, 3, 3),
        b4=fold_conv(g, FPN_DIM, aspp_in, 3, 3),
        gap=fold_conv(g, FPN_DIM, aspp_in, 1, 1),
        proj=fold_conv(g, FPN_DIM, 5 * FPN_DIM, 1, 1),
    )
    P["fpn_in"] = [fold_conv(g, FPN_DIM, fpn_inplanes[i], 1, 1, bn=True, bias=True)
                   for i in range(3)]
    P["fpn_out"] = [fold_conv(g, FPN_DIM, FPN_DIM, 3, 3) for _ in range(3)]
    P["fpn_align"] = [dict(down_h=fold_conv(g, FPN_DIM // 2, FPN_DIM, 1, 1, bn=False),
                           down_l=fold_conv(g, FPN_DIM // 2, FPN_DIM, 1, 1, bn=False),
                           flow=fold_conv(g, 2, FPN_DIM, 3, 3, bn=False)) for _ in range(3)]
    P["last_conv"] = fold_conv(g, FPN_DIM, 4 * FPN_DIM, 3, 3)
    P["cls"] = fold_conv(g, NUM_CLASSES, FPN_DIM, 1, 1, bn=False, bias=True)
    return P


# ----------------------------------------------------------------------------
# Module forward passes
# ----------------------------------------------------------------------------
def bottleneck(x, p):
    out = conv_apply(x, p["conv1"], relu=True)
    out = conv_apply(out, p["conv2"], relu=True,
                     stride=p["stride"], padding=p["dilation"], dilation=p["dilation"])
    if "down" in p:
        idn = conv_apply(x, p["down"], relu=False, stride=p["stride"])
    else:
        idn = x
    # conv3 + BN + residual add + ReLU fused into one Pallas epilogue (residual stays bf16
    # on the wire, upcast to f32 inside the kernel).
    return conv_apply(out, p["conv3"], relu=True, residual=idn)


def coord_att(x, p):
    N, H, W, C = x.shape
    x_h = jnp.mean(x, axis=2, keepdims=True)                       # (N,H,1,C)  pool over W
    x_w = jnp.mean(x, axis=1, keepdims=True)                       # (N,1,W,C)  pool over H
    x_w_t = jnp.transpose(x_w, (0, 2, 1, 3))                       # (N,W,1,C)
    y = jnp.concatenate([x_h, x_w_t], axis=1)                      # (N,H+W,1,C)
    y = conv_apply(y, p["conv1"], relu=False)
    y = y * jnp.clip(y + 3.0, 0.0, 6.0) / 6.0                      # h_swish
    y_h = y[:, :H]
    y_w = jnp.transpose(y[:, H:], (0, 2, 1, 3))
    a_h = jax.nn.sigmoid(conv_apply(y_h, p["conv_h"]))
    a_w = jax.nn.sigmoid(conv_apply(y_w, p["conv_w"]))
    return x * a_w * a_h


def aspp_forward(x, p):
    N, H, W, C = x.shape
    b1 = conv_apply(x, p["b1"], relu=True)
    b2 = conv_apply(x, p["b2"], relu=True, padding=6, dilation=6)
    b3 = conv_apply(x, p["b3"], relu=True, padding=12, dilation=12)
    b4 = conv_apply(x, p["b4"], relu=True, padding=18, dilation=18)
    gap = jnp.mean(x, axis=(1, 2), keepdims=True)
    gap = conv_apply(gap, p["gap"], relu=True)
    gap = upsample_bilinear_ac(gap, H, W)
    y = jnp.concatenate([b1.astype(jnp.float32), b2.astype(jnp.float32),
                         b3.astype(jnp.float32), b4.astype(jnp.float32),
                         gap.astype(jnp.float32)], axis=-1)
    return conv_apply(y, p["proj"], relu=True)   # Dropout(0.5) is identity in eval mode


def flow_warp(x, flow, out_h, out_w):
    norm = jnp.array([out_w, out_h], jnp.float32)
    ws = jnp.linspace(-1.0, 1.0, out_w)
    hs = jnp.linspace(-1.0, 1.0, out_h)
    gx, gy = jnp.meshgrid(ws, hs, indexing="xy")                   # (out_h,out_w)
    base = jnp.stack([gx, gy], axis=-1)                            # (out_h,out_w,2) in (x,y)
    grid = base[None] + flow.astype(jnp.float32) / norm
    return grid_sample_bilinear(x, grid)


def aligned_module(low, h, p):
    N, Hl, Wl, _ = low.shape
    h_orig = h
    low_f = conv_apply(low, p["down_l"])
    h_f = conv_apply(h, p["down_h"])
    h_f = upsample_bilinear_ac(h_f, Hl, Wl)
    flow = conv_apply(jnp.concatenate([h_f.astype(jnp.float32),
                                       low_f.astype(jnp.float32)], axis=-1),
                      p["flow"], padding=1)
    return flow_warp(h_orig, flow, Hl, Wl)


def head_forward(conv_out, P):
    aspp_out = aspp_forward(conv_out[-1], P["aspp"])
    f = aspp_out
    fpn_feature_list = [aspp_out]
    for i in reversed(range(len(conv_out) - 1)):                   # 2, 1, 0
        conv_x = conv_apply(conv_out[i], P["fpn_in"][i], relu=True)
        f = aligned_module(conv_x, f, P["fpn_align"][i])
        f = conv_x + f
        fpn_feature_list.append(conv_apply(f, P["fpn_out"][i], padding=1, relu=True))
    fpn_feature_list.reverse()
    Ho, Wo = fpn_feature_list[0].shape[1:3]
    fusion = [fpn_feature_list[0].astype(jnp.float32)] + \
             [upsample_bilinear_ac(t, Ho, Wo).astype(jnp.float32)
              for t in fpn_feature_list[1:]]
    x = jnp.concatenate(fusion, axis=-1)
    x = conv_apply(x, P["last_conv"], padding=1, relu=True)
    x = conv_apply(x, P["cls"])
    return x


def alignnet_forward(x_nchw, P):
    x = jnp.transpose(x_nchw, (0, 2, 3, 1)).astype(jnp.bfloat16)   # NCHW -> NHWC, bf16
    Hin, Win = x.shape[1], x.shape[2]
    # layer0
    x0 = conv_apply(x, P["stem"], relu=True, stride=2, padding=3)
    x0 = maxpool_3x3_s2_p1(x0)
    # layer1..4 (+ CoordAtt after layer3 / layer4)
    cur = x0
    feats = []
    for li in range(1, 5):
        for blk in P[f"layer{li}"]:
            cur = bottleneck(cur, blk)
        if li == 3:
            cur = coord_att(cur, P["ca3"])
        elif li == 4:
            cur = coord_att(cur, P["ca4"])
        feats.append(cur)
    out = head_forward(feats, P)
    out = upsample_bilinear_ac(out, Hin, Win)                      # Upsample(x, x_size[2:]), align_corners=True
    return jnp.transpose(out, (0, 3, 1, 2)).astype(jnp.float32)    # back to NCHW, f32 logits


# ----------------------------------------------------------------------------
if __name__ == "__main__":
    key = jax.random.PRNGKey(0)
    x = jax.random.normal(key, (2, 3, 64, 64), jnp.float32)
    params = build_params()
    # Whole forward jit-compiled with parameters closed over (kernel shapes stay static,
    # JAX glue fuses instead of dispatching eagerly).
    fwd = jax.jit(lambda inp: alignnet_forward(inp, params))
    out = jax.block_until_ready(fwd(x))
    assert out.shape == (2, NUM_CLASSES, 64, 64), out.shape
    assert bool(jnp.all(jnp.isfinite(out)))
    print("KERNEL_OK")
</pallas_src>

<mosaic_0001>
module attributes {stable_mosaic.version = 11 : i64} {
  func.func @_mm_affine_kernel(%arg0: i32, %arg1: memref<512x147xbf16, #tpu.memory_space<vmem>>, %arg2: memref<147x8xbf16, #tpu.memory_space<vmem>>, %arg3: memref<2x8xf32, #tpu.memory_space<vmem>>, %arg4: memref<512x8xbf16, #tpu.memory_space<vmem>>) attributes {dimension_semantics = [#tpu.dimension_semantics<parallel>], iteration_bounds = array<i64: 4>, scalar_prefetch = 0 : i64, scratch_operands = 0 : i64, tpu.core_type = #tpu.core_type<tc>, window_params = [{transform_indices = @transform_0, window_bounds = array<i64: 512, 147>}, {pipeline_mode = #tpu.pipeline_mode<synchronous>, transform_indices = @transform_1, window_bounds = array<i64: 147, 8>}, {pipeline_mode = #tpu.pipeline_mode<synchronous>, transform_indices = @transform_2, window_bounds = array<i64: 2, 8>}, {transform_indices = @transform_3, window_bounds = array<i64: 512, 8>}]} {
    %c0 = arith.constant 0 : index
    %c0_0 = arith.constant 0 : index
    %0 = vector.load %arg1[%c0, %c0_0] : memref<512x147xbf16, #tpu.memory_space<vmem>>, vector<512x147xbf16>
    %c0_1 = arith.constant 0 : index
    %c0_2 = arith.constant 0 : index
    %1 = vector.load %arg2[%c0_1, %c0_2] : memref<147x8xbf16, #tpu.memory_space<vmem>>, vector<147x8xbf16>
    %cst = arith.constant dense<0.000000e+00> : vector<512x8xf32>
    %2 = tpu.matmul %0, %1, %cst {dimension_numbers = #tpu.dot_dimension_numbers<[1], [0], [0], [1], [0, 0, 1, 1], [], []>} : vector<512x147xbf16>, vector<147x8xbf16>, vector<512x8xf32> -> vector<512x8xf32>
    %c0_3 = arith.constant 0 : index
    %c0_4 = arith.constant 0 : index
    %3 = vector.load %arg3[%c0_3, %c0_4] : memref<2x8xf32, #tpu.memory_space<vmem>>, vector<1x8xf32>
    %4 = vector.broadcast %3 : vector<1x8xf32> to vector<512x8xf32>
    %5 = arith.mulf %2, %4 : vector<512x8xf32>
    %c1 = arith.constant 1 : index
    %c0_5 = arith.constant 0 : index
    %6 = vector.load %arg3[%c1, %c0_5] : memref<2x8xf32, #tpu.memory_space<vmem>>, vector<1x8xf32>
    %7 = vector.broadcast %6 : vector<1x8xf32> to vector<512x8xf32>
    %8 = arith.addf %5, %7 : vector<512x8xf32>
    %cst_6 = arith.constant 0.000000e+00 : f32
    %9 = vector.broadcast %cst_6 : f32 to vector<512x8xf32>
    %10 = arith.maximumf %8, %9 : vector<512x8xf32>
    %11 = arith.truncf %10 : vector<512x8xf32> to vector<512x8xbf16>
    %c0_7 = arith.constant 0 : index
    %c0_8 = arith.constant 0 : index
    %12 = vector.load %arg4[%c0_7, %c0_8] : memref<512x8xbf16, #tpu.memory_space<vmem>>, vector<512x8xbf16>
    tpu.vector_store %arg4[%c0_7, %c0_8], %11 {strides = array<i32>} : memref<512x8xbf16, #tpu.memory_space<vmem>>, vector<512x8xbf16>,
    return
  }
  func.func @transform_0(%arg0: i32) -> (i32, i32) {
    %c0_i32 = arith.constant 0 : i32
    %c0_i32_0 = arith.constant 0 : i32
    return %arg0, %c0_i32 : i32, i32
  }
  func.func @transform_1(%arg0: i32) -> (i32, i32) {
    %c0_i32 = arith.constant 0 : i32
    %c0_i32_0 = arith.constant 0 : i32
    %c0_i32_1 = arith.constant 0 : i32
    return %c0_i32, %c0_i32_0 : i32, i32
  }
  func.func @transform_2(%arg0: i32) -> (i32, i32) {
    %c0_i32 = arith.constant 0 : i32
    %c0_i32_0 = arith.constant 0 : i32
    %c0_i32_1 = arith.constant 0 : i32
    return %c0_i32, %c0_i32_0 : i32, i32
  }
  func.func @transform_3(%arg0: i32) -> (i32, i32) {
    %c0_i32 = arith.constant 0 : i32
    %c0_i32_0 = arith.constant 0 : i32
    return %arg0, %c0_i32 : i32, i32
  }
}

</mosaic_0001>

<llo_original>
// kernel: matmul_affine.1
$region0: #{matmul_affine.1}
  #allocation0 [shape = 'u32[]', space=smem, size = 0x4, offset = 0x4, fixed_abs, tag = 'smem constant byte address 0x4 - core index']
  #allocation1 [shape = 'u32[144,128]{1,0:T(1,128)}', space=vmem, size = 0x12000, scoped, tag = 'internal scratch']
  %s0 = inlined_call_operand.vmem [shape: bf16[2048,147], index: 0, kind: input, shape index: {}]
  %s1 = inlined_call_operand.vmem [shape: bf16[147,8], index: 1, kind: input, shape index: {}]
  %s2 = inlined_call_operand.vmem [shape: f32[2,8], index: 2, kind: input, shape index: {}]
  %s3 = inlined_call_operand.vmem [shape: bf16[2048,8], index: 3, kind: output, shape index: {}]
  %s4 = sld [smem:[#allocation0]]
  $region45: #{matmul_affine.1} parent=0
    _
  %s6 = ssub.s32 1, %s4
  %s7 = scalar_select 0, %s6, %s4
  loop: start=0, step=1, limit=6
  $region2: #{matmul_affine.1} parent=0 // loop_pre_header
    _
  $region3: #{matmul_affine.1} parent=0 // loop_header
    %s9 = sphi 0, %s13
    %p10 = scmp.ge.s32.totalorder %s9, 6
    %s19 = sphi 0, %s21
    %s22 = sphi 0, %s19
    %s23 = sphi 0, %s22
    %s39 = sphi 0, %s23
    %s43 = sphi 0, %s43
    %s45 = sphi 0, %s43
    %s46 = sphi 0, %s45
    %s60 = sphi 0, %s46
    %s64 = sphi 0, %s64
    %s66 = sphi 0, %s64
    %s67 = sphi 0, %s66
    %s81 = sphi 0, %s67
    %s87 = sphi 0, %s89
    %s90 = sphi 0, %s87
    %s91 = sphi 0, %s90
    %s107 = sphi 0, %s91
  $region4: #{matmul_affine.1} parent=0 // loop_header_branch
    %12 = sbr.rel (%p10) target = $region8
  $region5: #{matmul_affine.1} parent=0 // loop_body
    %s14 = ssub.s32 %s9, 1
    %s15 = ssub.s32 %s9, 2
    %s16 = sadd.s32 %s9, 1
    %s17 = ssub.s32 %s9, %s16
    %p18 = scmp.eq.s32.totalorder %s17, 0
    %s20 = sadd.s32 %s19, 1
    %s21 = scalar_select %p18, %s19, %s20
    %p24 = pneg %p18
    %p25 = scmp.eq.s32.totalorder %s9, 3
    %p26 = por %p24, %p25
    %p27 = scmp.ne.s32.totalorder %s19, %s22
    %p28 = scmp.eq.s32.totalorder %s9, 0
    %p29 = por %p27, %p28
    %p30 = scmp.ne.s32.totalorder %s19, %s22
    %p31 = scmp.eq.s32.totalorder %s14, 3
    %p32 = por %p30, %p31
    %p33 = scmp.ne.s32.totalorder %s22, %s23
    %p34 = scmp.eq.s32.totalorder %s14, 0
    %p35 = por %p33, %p34
    %p36 = scmp.ne.s32.totalorder %s22, %s23
    %p37 = scmp.eq.s32.totalorder %s15, 3
    %p38 = por %p36, %p37
    %p40 = scmp.ne.s32.totalorder %s23, %s39
    %p41 = scmp.eq.s32.totalorder %s15, 0
    %p42 = por %p40, %p41
    %s44 = sadd.s32 %s43, 1
    %p47 = scmp.eq.s32.totalorder %s9, 3
    %p48 = scmp.ne.s32.totalorder %s43, %s45
    %p49 = scmp.eq.s32.totalorder %s9, 0
    %p50 = por %p48, %p49
    %p51 = scmp.ne.s32.totalorder %s43, %s45
    %p52 = scmp.eq.s32.totalorder %s14, 3
    %p53 = por %p51, %p52
    %p54 = scmp.ne.s32.totalorder %s45, %s46
    %p55 = scmp.eq.s32.totalorder %s14, 0
    %p56 = por %p54, %p55
    %p57 = scmp.ne.s32.totalorder %s45, %s46
    %p58 = scmp.eq.s32.totalorder %s15, 3
    %p59 = por %p57, %p58
    %p61 = scmp.ne.s32.totalorder %s46, %s60
    %p62 = scmp.eq.s32.totalorder %s15, 0
    %p63 = por %p61, %p62
    %s65 = sadd.s32 %s64, 1
    %p68 = scmp.eq.s32.totalorder %s9, 3
    %p69 = scmp.ne.s32.totalorder %s64, %s66
    %p70 = scmp.eq.s32.totalorder %s9, 0
    %p71 = por %p69, %p70
    %p72 = scmp.ne.s32.totalorder %s64, %s66
    %p73 = scmp.eq.s32.totalorder %s14, 3
    %p74 = por %p72, %p73
    %p75 = scmp.ne.s32.totalorder %s66, %s67
    %p76 = scmp.eq.s32.totalorder %s14, 0
    %p77 = por %p75, %p76
    %p78 = scmp.ne.s32.totalorder %s66, %s67
    %p79 = scmp.eq.s32.totalorder %s15, 3
    %p80 = por %p78, %p79
    %p82 = scmp.ne.s32.totalorder %s67, %s81
    %p83 = scmp.eq.s32.totalorder %s15, 0
    %p84 = por %p82, %p83
    %s85 = ssub.s32 %s9, %s16
    %p86 = scmp.eq.s32.totalorder %s85, 0
    %s88 = sadd.s32 %s87, 1
    %s89 = scalar_select %p86, %s87, %s88
    %p92 = pneg %p86
    %p93 = scmp.eq.s32.totalorder %s9, 3
    %p94 = por %p92, %p93
    %p95 = scmp.ne.s32.totalorder %s87, %s90
    %p96 = scmp.eq.s32.totalorder %s9, 0
    %p97 = por %p95, %p96
    %p98 = scmp.ne.s32.totalorder %s87, %s90
    %p99 = scmp.eq.s32.totalorder %s14, 3
    %p100 = por %p98, %p99
    %p101 = scmp.ne.s32.totalorder %s90, %s91
    %p102 = scmp.eq.s32.totalorder %s14, 0
    %p103 = por %p101, %p102
    %p104 = scmp.ne.s32.totalorder %s90, %s91
    %p105 = scmp.eq.s32.totalorder %s15, 3
    %p106 = por %p104, %p105
    %p108 = scmp.ne.s32.totalorder %s91, %s107
    %p109 = scmp.eq.s32.totalorder %s15, 0
    %p110 = por %p108, %p109
    %p111 = scmp.le.s32.totalorder 1, %s9
    %p112 = scmp.lt.s32.totalorder %s9, 5
    %p113 = pnand %p111, %p112
    %p114 = pneg %p113
    // Predicated region
    $region9: #{matmul_affine.1} parent=5 // pred_check
      _
    $region10: #{matmul_affine.1} parent=5 // pred_check_branch
      %116 = sbr.rel (%p113) target = $region12
    $region11: #{matmul_affine.1} parent=5 // pred_region
      %s117 = ssub.s32 %s9, 1
      // Predicated region
      $region13: #{matmul_affine.1} parent=11 // pred_check
        %p118 = pneg %p56
      $region14: #{matmul_affine.1} parent=11 // pred_check_branch
        %120 = sbr.rel (%p118) target = $region16
      $region15: #{matmul_affine.1} parent=11 // pred_region
        _
      $region16: #{matmul_affine.1} parent=11 // pred_fallthru
        _
      // Predicated region
      $region17: #{matmul_affine.1} parent=11 // pred_check
        %p121 = pneg %p77
      $region18: #{matmul_affine.1} parent=11 // pred_check_branch
        %123 = sbr.rel (%p121) target = $region20
      $region19: #{matmul_affine.1} parent=11 // pred_region
        _
      $region20: #{matmul_affine.1} parent=11 // pred_fallthru
        _
    $region12: #{matmul_affine.1} parent=5 // pred_fallthru
      _
    %p124 = scmp.lt.s32.totalorder %s9, 4
    // Predicated region
    $region21: #{matmul_affine.1} parent=5 // pred_check
      %p125 = pneg %p124
    $region22: #{matmul_affine.1} parent=5 // pred_check_branch
      %127 = sbr.rel (%p125) target = $region24
    $region23: #{matmul_affine.1} parent=5 // pred_region
      // Predicated region
      $region25: #{matmul_affine.1} parent=23 // pred_check
        %p128 = pneg %p29
      $region26: #{matmul_affine.1} parent=23 // pred_check_branch
        %130 = sbr.rel (%p128) target = $region28
      $region27: #{matmul_affine.1} parent=23 // pred_region
        %s131 = smul.u32 64, %s9
        %p132 = scmp.lt.s32.totalorder %s131, 255
        %s133 = scalar_select %p132, %s131, 255
        %s134 = smul.addr %s133, 2
        %s135 = smul.addr %s134, 4
        %s136 = scalar_lea.vmem %s0, %s135
        %s137 = smul.u32 64, %s9
      $region28: #{matmul_affine.1} parent=23 // pred_fallthru
        _
    $region24: #{matmul_affine.1} parent=5 // pred_fallthru
      _
    %p138 = scmp.le.s32.totalorder 1, %s9
    %p139 = scmp.lt.s32.totalorder %s9, 5
    %p140 = pnand %p138, %p139
    %p141 = pneg %p140
    // Predicated region
    $region29: #{matmul_affine.1} parent=5 // pred_check
      _
    $region30: #{matmul_affine.1} parent=5 // pred_check_branch
      %143 = sbr.rel (%p140) target = $region32
    $region31: #{matmul_affine.1} parent=5 // pred_region
      %s144 = ssub.s32 %s9, 1
      %s145 = smul.u32 64, %s14
      %p146 = scmp.lt.s32.totalorder %s145, 255
      %s147 = scalar_select %p146, %s145, 255
      %s148 = smul.addr %s147, 2
      %s149 = smul.addr %s148, 4
      %s150 = scalar_lea.vmem %s0, %s149
      %p151 = pneg %p35
      %p152 = pneg %p32
      %p153 = pneg %p56
      %p154 = pneg %p53
      %p155 = pneg %p77
      %p156 = pneg %p74
      %p157 = pneg %p103
      %p158 = pneg %p100
      %s159 = smul.u32 64, %s14
      %p160 = scmp.lt.s32.totalorder %s159, 255
      %s161 = scalar_select %p160, %s159, 255
      %s162 = smul.addr %s161, 4
      %s163 = scalar_lea.vmem %s3, %s162
      %s164 = smul.u32 64, %s14
      %p165 = scmp.lt.s32.totalorder %s164, 255
      %s166 = scalar_select %p165, %s164, 255
      %s167 = smul.addr %s166, 2
      %s168 = smul.addr %s167, 4
      %s169 = scalar_lea.vmem %s0, %s168
      %s170 = smul.u32 64, %s14
      %s171 = smul.u32 64, %s14
      %p172 = scmp.lt.s32.totalorder %s171, 255
      %s173 = scalar_select %p172, %s171, 255
      %s174 = smul.addr %s173, 4
      %s175 = scalar_lea.vmem %s3, %s174
      %s176 = smul.u32 64, %s14
      %v178 = vld [vmem:[%s169] sm:$0xff]
      %v179 = vld [vmem:[%s169 + $0x8] sm:$0xff]
      %v180 = vld [vmem:[%s169 + $0x10] sm:$0xff]
      %v181 = vld [vmem:[%s169 + $0x18] sm:$0xff]
      %v182 = vld [vmem:[%s169 + $0x20] sm:$0xff]
      %v183 = vld [vmem:[%s169 + $0x28] sm:$0xff]
      %v184 = vld [vmem:[%s169 + $0x30] sm:$0xff]
      %v185 = vld [vmem:[%s169 + $0x38] sm:$0xff]
      %v186 = vld [vmem:[%s169 + $0x40] sm:$0xff]
      %v187 = vld [vmem:[%s169 + $0x48] sm:$0xff]
      %v188 = vld [vmem:[%s169 + $0x50] sm:$0xff]
      %v189 = vld [vmem:[%s169 + $0x58] sm:$0xff]
      %v190 = vld [vmem:[%s169 + $0x60] sm:$0xff]
      %v191 = vld [vmem:[%s169 + $0x68] sm:$0xff]
      %v192 = vld [vmem:[%s169 + $0x70] sm:$0xff]
      %v193 = vld [vmem:[%s169 + $0x78] sm:$0xff]
      %v194 = vld [vmem:[%s169 + $0x80] sm:$0xff]
      %v195 = vld [vmem:[%s169 + $0x88] sm:$0xff]
      %v196 = vld [vmem:[%s169 + $0x90] sm:$0xff]
      %v197 = vld [vmem:[%s169 + $0x98] sm:$0xff]
      %v198 = vld [vmem:[%s169 + $0xa0] sm:$0xff]
      %v199 = vld [vmem:[%s169 + $0xa8] sm:$0xff]
      %v200 = vld [vmem:[%s169 + $0xb0] sm:$0xff]
      %v201 = vld [vmem:[%s169 + $0xb8] sm:$0xff]
      %v202 = vld [vmem:[%s169 + $0xc0] sm:$0xff]
      %v203 = vld [vmem:[%s169 + $0xc8] sm:$0xff]
      %v204 = vld [vmem:[%s169 + $0xd0] sm:$0xff]
      %v205 = vld [vmem:[%s169 + $0xd8] sm:$0xff]
      %v206 = vld [vmem:[%s169 + $0xe0] sm:$0xff]
      %v207 = vld [vmem:[%s169 + $0xe8] sm:$0xff]
      %v208 = vld [vmem:[%s169 + $0xf0] sm:$0xff]
      %v209 = vld [vmem:[%s169 + $0xf8] sm:$0xff]
      %v210 = vld [vmem:[%s169 + $0x100] sm:$0xff]
      %v211 = vld [vmem:[%s169 + $0x108] sm:$0xff]
      %v212 = vld [vmem:[%s169 + $0x110] sm:$0xff]
      %v213 = vld [vmem:[%s169 + $0x118] sm:$0xff]
      %v214 = vld [vmem:[%s169 + $0x120] sm:$0xff]
      %v215 = vld [vmem:[%s169 + $0x128] sm:$0xff]
      %v216 = vld [vmem:[%s169 + $0x130] sm:$0xff]
      %v217 = vld [vmem:[%s169 + $0x138] sm:$0xff]
      %v218 = vld [vmem:[%s169 + $0x140] sm:$0xff]
      %v219 = vld [vmem:[%s169 + $0x148] sm:$0xff]
      %v220 = vld [vmem:[%s169 + $0x150] sm:$0xff]
      %v221 = vld [vmem:[%s169 + $0x158] sm:$0xff]
      %v222 = vld [vmem:[%s169 + $0x160] sm:$0xff]
      %v223 = vld [vmem:[%s169 + $0x168] sm:$0xff]
      %v224 = vld [vmem:[%s169 + $0x170] sm:$0xff]
      %v225 = vld [vmem:[%s169 + $0x178] sm:$0xff]
      %v226 = vld [vmem:[%s169 + $0x180] sm:$0xff]
      %v227 = vld [vmem:[%s169 + $0x188] sm:$0xff]
      %v228 = vld [vmem:[%s169 + $0x190] sm:$0xff]
      %v229 = vld [vmem:[%s169 + $0x198] sm:$0xff]
      %v230 = vld [vmem:[%s169 + $0x1a0] sm:$0xff]
      %v231 = vld [vmem:[%s169 + $0x1a8] sm:$0xff]
      %v232 = vld [vmem:[%s169 + $0x1b0] sm:$0xff]
      %v233 = vld [vmem:[%s169 + $0x1b8] sm:$0xff]
      %v234 = vld [vmem:[%s169 + $0x1c0] sm:$0xff]
      %v235 = vld [vmem:[%s169 + $0x1c8] sm:$0xff]
      %v236 = vld [vmem:[%s169 + $0x1d0] sm:$0xff]
      %v237 = vld [vmem:[%s169 + $0x1d8] sm:$0xff]
      %v238 = vld [vmem:[%s169 + $0x1e0] sm:$0xff]
      %v239 = vld [vmem:[%s169 + $0x1e8] sm:$0xff]
      %v240 = vld [vmem:[%s169 + $0x1f0] sm:$0xff]
      %v241 = vld [vmem:[%s169 + $0x1f8] sm:$0xff]
      %v242 = vld [vmem:[%s1] sm:$0xf]
      %v243 = vld [vmem:[%s1 + $0x4] sm:$0xf]
      %v244 = vld [vmem:[%s1 + $0x8] sm:$0xf]
      %v245 = vld [vmem:[%s1 + $0xc] sm:$0xf]
      %v246 = vld [vmem:[%s1 + $0x10] sm:$0xf]
      %v247 = vld [vmem:[%s1 + $0x14] sm:$0xf]
      %v248 = vld [vmem:[%s1 + $0x18] sm:$0xf]
      %v249 = vld [vmem:[%s1 + $0x1c] sm:$0xf]
      %v250 = vld [vmem:[%s1 + $0x20] sm:$0xf]
      %v251 = vld [vmem:[%s1 + $0x24] sm:$0xf]
      %v252 = vld [vmem:[%s1 + $0x28] sm:$0xf]
      %v253 = vld [vmem:[%s1 + $0x2c] sm:$0xf]
      %v254 = vld [vmem:[%s1 + $0x30] sm:$0xf]
      %v255 = vld [vmem:[%s1 + $0x34] sm:$0xf]
      %v256 = vld [vmem:[%s1 + $0x38] sm:$0xf]
      %v257 = vld [vmem:[%s1 + $0x3c] sm:$0xf]
      %v258 = vld [vmem:[%s1 + $0x40] sm:$0xf]
      %v259 = vld [vmem:[%s1 + $0x44] sm:$0xf]
      %v260 = vld [vmem:[%s1 + $0x48] sm:$0x3]
      %v325 = vunpack.c.l.b16 %v178
      %v326 = vunpack.c.h.b16 %v178
      %v327 = vunpack.c.l.b16 %v179
      %v328 = vunpack.c.h.b16 %v179
      %v329 = vunpack.c.l.b16 %v180
      %v330 = vunpack.c.h.b16 %v180
      %v331 = vunpack.c.l.b16 %v181
      %v332 = vunpack.c.h.b16 %v181
      %v333 = vunpack.c.l.b16 %v182
      %v334 = vunpack.c.h.b16 %v182
      %v335 = vunpack.c.l.b16 %v183
      %v336 = vunpack.c.h.b16 %v183
      %v337 = vunpack.c.l.b16 %v184
      %v338 = vunpack.c.h.b16 %v184
      %v339 = vunpack.c.l.b16 %v185
      %v340 = vunpack.c.h.b16 %v185
      %v341 = vunpack.c.l.b16 %v186
      %v342 = vunpack.c.h.b16 %v186
      %v343 = vunpack.c.l.b16 %v187
      %v344 = vunpack.c.h.b16 %v187
      %v345 = vunpack.c.l.b16 %v188
      %v346 = vunpack.c.h.b16 %v188
      %v347 = vunpack.c.l.b16 %v189
      %v348 = vunpack.c.h.b16 %v189
      %v349 = vunpack.c.l.b16 %v190
      %v350 = vunpack.c.h.b16 %v190
      %v351 = vunpack.c.l.b16 %v191
      %v352 = vunpack.c.h.b16 %v191
      %v353 = vunpack.c.l.b16 %v192
      %v354 = vunpack.c.h.b16 %v192
      %v355 = vunpack.c.l.b16 %v193
      %v356 = vunpack.c.h.b16 %v193
      %v357 = vunpack.c.l.b16 %v194
      %v358 = vunpack.c.h.b16 %v194
      %v359 = vunpack.c.l.b16 %v195
      %v360 = vunpack.c.h.b16 %v195
      %v361 = vunpack.c.l.b16 %v196
      %v362 = vunpack.c.h.b16 %v196
      %v363 = vunpack.c.l.b16 %v197
      %v364 = vunpack.c.h.b16 %v197
      %v365 = vunpack.c.l.b16 %v198
      %v366 = vunpack.c.h.b16 %v198
      %v367 = vunpack.c.l.b16 %v199
      %v368 = vunpack.c.h.b16 %v199
      %v369 = vunpack.c.l.b16 %v200
      %v370 = vunpack.c.h.b16 %v200
      %v371 = vunpack.c.l.b16 %v201
      %v372 = vunpack.c.h.b16 %v201
      %v373 = vunpack.c.l.b16 %v202
      %v374 = vunpack.c.h.b16 %v202
      %v375 = vunpack.c.l.b16 %v203
      %v376 = vunpack.c.h.b16 %v203
      %v377 = vunpack.c.l.b16 %v204
      %v378 = vunpack.c.h.b16 %v204
      %v379 = vunpack.c.l.b16 %v205
      %v380 = vunpack.c.h.b16 %v205
      %v381 = vunpack.c.l.b16 %v206
      %v382 = vunpack.c.h.b16 %v206
      %v383 = vunpack.c.l.b16 %v207
      %v384 = vunpack.c.h.b16 %v207
      %v385 = vunpack.c.l.b16 %v208
      %v386 = vunpack.c.h.b16 %v208
      %v387 = vunpack.c.l.b16 %v209
      %v388 = vunpack.c.h.b16 %v209
      %v389 = vunpack.c.l.b16 %v210
      %v390 = vunpack.c.h.b16 %v210
      %v391 = vunpack.c.l.b16 %v211
      %v392 = vunpack.c.h.b16 %v211
      %v393 = vunpack.c.l.b16 %v212
      %v394 = vunpack.c.h.b16 %v212
      %v395 = vunpack.c.l.b16 %v213
      %v396 = vunpack.c.h.b16 %v213
      %v397 = vunpack.c.l.b16 %v214
      %v398 = vunpack.c.h.b16 %v214
      %v399 = vunpack.c.l.b16 %v215
      %v400 = vunpack.c.h.b16 %v215
      %v401 = vunpack.c.l.b16 %v216
      %v402 = vunpack.c.h.b16 %v216
      %v403 = vunpack.c.l.b16 %v217
      %v404 = vunpack.c.h.b16 %v217
      %v405 = vunpack.c.l.b16 %v218
      %v406 = vunpack.c.h.b16 %v218
      %v407 = vunpack.c.l.b16 %v219
      %v408 = vunpack.c.h.b16 %v219
      %v409 = vunpack.c.l.b16 %v220
      %v410 = vunpack.c.h.b16 %v220
      %v411 = vunpack.c.l.b16 %v221
      %v412 = vunpack.c.h.b16 %v221
      %v413 = vunpack.c.l.b16 %v222
      %v414 = vunpack.c.h.b16 %v222
      %v415 = vunpack.c.l.b16 %v223
      %v416 = vunpack.c.h.b16 %v223
      %v417 = vunpack.c.l.b16 %v224
      %v418 = vunpack.c.h.b16 %v224
      %v419 = vunpack.c.l.b16 %v225
      %v420 = vunpack.c.h.b16 %v225
      %v421 = vunpack.c.l.b16 %v226
      %v422 = vunpack.c.h.b16 %v226
      %v423 = vunpack.c.l.b16 %v227
      %v424 = vunpack.c.h.b16 %v227
      %v425 = vunpack.c.l.b16 %v228
      %v426 = vunpack.c.h.b16 %v228
      %v427 = vunpack.c.l.b16 %v229
      %v428 = vunpack.c.h.b16 %v229
      %v429 = vunpack.c.l.b16 %v230
      %v430 = vunpack.c.h.b16 %v230
      %v431 = vunpack.c.l.b16 %v231
      %v432 = vunpack.c.h.b16 %v231
      %v433 = vunpack.c.l.b16 %v232
      %v434 = vunpack.c.h.b16 %v232
      %v435 = vunpack.c.l.b16 %v233
      %v436 = vunpack.c.h.b16 %v233
      %v437 = vunpack.c.l.b16 %v234
      %v438 = vunpack.c.h.b16 %v234
      %v439 = vunpack.c.l.b16 %v235
      %v440 = vunpack.c.h.b16 %v235
      %v441 = vunpack.c.l.b16 %v236
      %v442 = vunpack.c.h.b16 %v236
      %v443 = vunpack.c.l.b16 %v237
      %v444 = vunpack.c.h.b16 %v237
      %v445 = vunpack.c.l.b16 %v238
      %v446 = vunpack.c.h.b16 %v238
      %v447 = vunpack.c.l.b16 %v239
      %v448 = vunpack.c.h.b16 %v239
      %v449 = vunpack.c.l.b16 %v240
      %v450 = vunpack.c.h.b16 %v240
      %v451 = vunpack.c.l.b16 %v241
      %v452 = vunpack.c.h.b16 %v241
      %v453 = vpack.c.b16 %v327, %v325
      %v454 = vpack.c.b16 %v328, %v326
      %v455 = vpack.c.b16 %v331, %v329
      %v456 = vpack.c.b16 %v332, %v330
      %v457 = vpack.c.b16 %v335, %v333
      %v458 = vpack.c.b16 %v336, %v334
      %v459 = vpack.c.b16 %v339, %v337
      %v460 = vpack.c.b16 %v340, %v338
      %v461 = vpack.c.b16 %v343, %v341
      %v462 = vpack.c.b16 %v344, %v342
      %v463 = vpack.c.b16 %v347, %v345
      %v464 = vpack.c.b16 %v348, %v346
      %v465 = vpack.c.b16 %v351, %v349
      %v466 = vpack.c.b16 %v352, %v350
      %v467 = vpack.c.b16 %v355, %v353
      %v468 = vpack.c.b16 %v356, %v354
      %v469 = vpack.c.b16 %v359, %v357
      %v470 = vpack.c.b16 %v360, %v358
      %v471 = vpack.c.b16 %v363, %v361
      %v472 = vpack.c.b16 %v364, %v362
      %v473 = vpack.c.b16 %v367, %v365
      %v474 = vpack.c.b16 %v368, %v366
      %v475 = vpack.c.b16 %v371, %v369
      %v476 = vpack.c.b16 %v372, %v370
      %v477 = vpack.c.b16 %v375, %v373
      %v478 = vpack.c.b16 %v376, %v374
      %v479 = vpack.c.b16 %v379, %v377
      %v480 = vpack.c.b16 %v380, %v378
      %v481 = vpack.c.b16 %v383, %v381
      %v482 = vpack.c.b16 %v384, %v382
      %v483 = vpack.c.b16 %v387, %v385
      %v484 = vpack.c.b16 %v388, %v386
      %v485 = vpack.c.b16 %v391, %v389
      %v486 = vpack.c.b16 %v392, %v390
      %v487 = vpack.c.b16 %v395, %v393
      %v488 = vpack.c.b16 %v396, %v394
      %v489 = vpack.c.b16 %v399, %v397
      %v490 = vpack.c.b16 %v400, %v398
      %v491 = vpack.c.b16 %v403, %v401
      %v492 = vpack.c.b16 %v404, %v402
      %v493 = vpack.c.b16 %v407, %v405
      %v494 = vpack.c.b16 %v408, %v406
      %v495 = vpack.c.b16 %v411, %v409
      %v496 = vpack.c.b16 %v412, %v410
      %v497 = vpack.c.b16 %v415, %v413
      %v498 = vpack.c.b16 %v416, %v414
      %v499 = vpack.c.b16 %v419, %v417
      %v500 = vpack.c.b16 %v420, %v418
      %v501 = vpack.c.b16 %v423, %v421
      %v502 = vpack.c.b16 %v424, %v422
      %v503 = vpack.c.b16 %v427, %v425
      %v504 = vpack.c.b16 %v428, %v426
      %v505 = vpack.c.b16 %v431, %v429
      %v506 = vpack.c.b16 %v432, %v430
      %v507 = vpack.c.b16 %v435, %v433
      %v508 = vpack.c.b16 %v436, %v434
      %v509 = vpack.c.b16 %v439, %v437
      %v510 = vpack.c.b16 %v440, %v438
      %v511 = vpack.c.b16 %v443, %v441
      %v512 = vpack.c.b16 %v444, %v442
      %v513 = vpack.c.b16 %v447, %v445
      %v514 = vpack.c.b16 %v448, %v446
      %v515 = vpack.c.b16 %v451, %v449
      %v516 = vpack.c.b16 %v452, %v450
      %v568 = vunpack.c.l.b16 %v242
      %v569 = vunpack.c.l.b16 %v243
      %v570 = vunpack.c.l.b16 %v244
      %v571 = vunpack.c.l.b16 %v245
      %v572 = vunpack.c.l.b16 %v246
      %v573 = vunpack.c.l.b16 %v247
      %v574 = vunpack.c.l.b16 %v248
      %v575 = vunpack.c.l.b16 %v249
      %v576 = vunpack.c.l.b16 %v250
      %v577 = vunpack.c.l.b16 %v251
      %v578 = vunpack.c.l.b16 %v252
      %v579 = vunpack.c.l.b16 %v253
      %v580 = vunpack.c.l.b16 %v254
      %v581 = vunpack.c.l.b16 %v255
      %v582 = vunpack.c.l.b16 %v256
      %v583 = vunpack.c.l.b16 %v257
      %v584 = vunpack.c.l.b16 %v258
      %v585 = vunpack.c.l.b16 %v259
      %v586 = vunpack.c.l.b16 %v260
      %v587 = vpack.c.b16 %v569, %v568
      %v588 = vpack.c.b16 %v571, %v570
      %v589 = vpack.c.b16 %v573, %v572
      %v590 = vpack.c.b16 %v575, %v574
      %v591 = vpack.c.b16 %v577, %v576
      %v592 = vpack.c.b16 %v579, %v578
      %v593 = vpack.c.b16 %v581, %v580
      %v594 = vpack.c.b16 %v583, %v582
      %v595 = vpack.c.b16 %v585, %v584
      %v596 = vpack.c.b16 %v586, %v586
      %vm606 = vcmask 154624
      %v608 = vsel %vm606, %v454, 0
      %v611 = vsel %vm606, %v456, 0
      %v614 = vsel %vm606, %v458, 0
      %v617 = vsel %vm606, %v460, 0
      %v620 = vsel %vm606, %v462, 0
      %v623 = vsel %vm606, %v464, 0
      %v626 = vsel %vm606, %v466, 0
      %v629 = vsel %vm606, %v468, 0
      %v632 = vsel %vm606, %v470, 0
      %v635 = vsel %vm606, %v472, 0
      %v638 = vsel %vm606, %v474, 0
      %v641 = vsel %vm606, %v476, 0
      %v644 = vsel %vm606, %v478, 0
      %v647 = vsel %vm606, %v480, 0
      %v650 = vsel %vm606, %v482, 0
      %v653 = vsel %vm606, %v484, 0
      %v656 = vsel %vm606, %v486, 0
      %v659 = vsel %vm606, %v488, 0
      %v662 = vsel %vm606, %v490, 0
      %v665 = vsel %vm606, %v492, 0
      %v668 = vsel %vm606, %v494, 0
      %v671 = vsel %vm606, %v496, 0
      %v674 = vsel %vm606, %v498, 0
      %v677 = vsel %vm606, %v500, 0
      %v680 = vsel %vm606, %v502, 0
      %v683 = vsel %vm606, %v504, 0
      %v686 = vsel %vm606, %v506, 0
      %v689 = vsel %vm606, %v508, 0
      %v692 = vsel %vm606, %v510, 0
      %v695 = vsel %vm606, %v512, 0
      %v698 = vsel %vm606, %v514, 0
      %v701 = vsel %vm606, %v516, 0
      %vm703 = vcmask 1040384
      %vm704 = vcmask 1041408
      %v705 = vsel %vm703, 4294967295, 65535
      %v706 = vsel %vm704, %v705, 0
      %v708 = vand.u32 %v596, %v706
      %710 = vmatprep.subr.bf16.mxu0 0
      %711 = vmatpush1.bf16.msra.mxu0 %v587
      %712 = vmatprep.subr.bf16.mxu0 0
      %713 = vmatpush1.bf16.msra.mxu0 %v588
      %714 = vmatprep.subr.bf16.mxu0 0
      %715 = vmatpush1.bf16.msra.mxu0 %v589
      %716 = vmatprep.subr.bf16.mxu0 0
      %717 = vmatpush1.bf16.msra.mxu0 %v590
      %718 = vmatprep.subr.bf16.mxu0 0
      %719 = vmatpush1.bf16.msra.mxu0 %v591
      %720 = vmatprep.subr.bf16.mxu0 0
      %721 = vmatpush1.bf16.msra.mxu0 %v592
      %722 = vmatprep.subr.bf16.mxu0 0
      %723 = vmatpush1.bf16.msra.mxu0 %v593
      %724 = vmatprep.subr.bf16.mxu0 0
      %725 = vmatpush1.bf16.msra.mxu0 %v594
      %726 = vmatprep.subr.bf16.mxu0 0
      %727 = vmatpush1.bf16.msra.mxu0 %v595
      %728 = vmatprep.subr.bf16.mxu0 0
      %729 = vmatpush1.bf16.msra.mxu0 %v708
      %730 = vmatprep.subr.bf16.mxu0 0
      %731 = vmatpush1.bf16.msra.mxu0 0
      %732 = vmatprep.subr.bf16.mxu0 0
      %733 = vmatpush1.bf16.msra.mxu0 0
      %734 = vmatprep.subr.bf16.mxu0 0
      %735 = vmatpush1.bf16.msra.mxu0 0
      %736 = vmatprep.subr.bf16.mxu0 0
      %737 = vmatpush1.bf16.msra.mxu0 0
      %738 = vmatprep.subr.bf16.mxu0 0
      %739 = vmatpush1.bf16.msra.mxu0 0
      %740 = vmatprep.subr.bf16.mxu0 0
      %741 = vmatpush1.bf16.msra.mxu0 0
      %742 = vmatprep.mubr.bf16.mxu0 %v608
      %743 = vmatmul.mubr.bf16.gmra.mrb[0].mxu0 %v453
      %v744 = vpop.f32.mrb[0].mxu0
      %v745 = vadd.f32 0.0, %v744
      %v746 = vpop.f32.mrb[0].mxu0
      %v747 = vpop.f32.mrb[0].mxu0
      %v748 = vadd.f32 0.0, %v747
      %v749 = vpop.f32.mrb[0].mxu0
      %750 = vmatprep.mubr.bf16.mxu0 %v611
      %751 = vmatmul.mubr.bf16.gmra.mrb[0].mxu0 %v455
      %v752 = vpop.f32.mrb[0].mxu0
      %v753 = vadd.f32 0.0, %v752
      %v754 = vpop.f32.mrb[0].mxu0
      %v755 = vpop.f32.mrb[0].mxu0
      %v756 = vadd.f32 0.0, %v755
      %v757 = vpop.f32.mrb[0].mxu0
      %758 = vmatprep.mubr.bf16.mxu0 %v614
      %759 = vmatmul.mubr.bf16.gmra.mrb[0].mxu0 %v457
      %v760 = vpop.f32.mrb[0].mxu0
      %v761 = vadd.f32 0.0, %v760
      %v762 = vpop.f32.mrb[0].mxu0
      %v763 = vpop.f32.mrb[0].mxu0
      %v764 = vadd.f32 0.0, %v763
      %v765 = vpop.f32.mrb[0].mxu0
      %766 = vmatprep.mubr.bf16.mxu0 %v617
      %767 = vmatmul.mubr.bf16.gmra.mrb[0].mxu0 %v459
      %v768 = vpop.f32.mrb[0].mxu0
      %v769 = vadd.f32 0.0, %v768
      %v770 = vpop.f32.mrb[0].mxu0
      %v771 = vpop.f32.mrb[0].mxu0
      %v772 = vadd.f32 0.0, %v771
      %v773 = vpop.f32.mrb[0].mxu0
      %774 = vmatprep.mubr.bf16.mxu0 %v620
      %775 = vmatmul.mubr.bf16.gmra.mrb[0].mxu0 %v461
      %v776 = vpop.f32.mrb[0].mxu0
      %v777 = vadd.f32 0.0, %v776
      %v778 = vpop.f32.mrb[0].mxu0
      %v779 = vpop.f32.mrb[0].mxu0
      %v780 = vadd.f32 0.0, %v779
      %v781 = vpop.f32.mrb[0].mxu0
      %782 = vmatprep.mubr.bf16.mxu0 %v623
      %783 = vmatmul.mubr.bf16.gmra.mrb[0].mxu0 %v463
      %v784 = vpop.f32.mrb[0].mxu0
      %v785 = vadd.f32 0.0, %v784
      %v786 = vpop.f32.mrb[0].mxu0
      %v787 = vpop.f32.mrb[0].mxu0
      %v788 = vadd.f32 0.0, %v787
      %v789 = vpop.f32.mrb[0].mxu0
      %790 = vmatprep.mubr.bf16.mxu0 %v626
      %791 = vmatmul.mubr.bf16.gmra.mrb[0].mxu0 %v465
      %v792 = vpop.f32.mrb[0].mxu0
      %v793 = vadd.f32 0.0, %v792
      %v794 = vpop.f32.mrb[0].mxu0
      %v795 = vpop.f32.mrb[0].mxu0
      %v796 = vadd.f32 0.0, %v795
      %v797 = vpop.f32.mrb[0].mxu0
      %798 = vmatprep.mubr.bf16.mxu0 %v629
      %799 = vmatmul.mubr.bf16.gmra.mrb[0].mxu0 %v467
      %v800 = vpop.f32.mrb[0].mxu0
      %v801 = vadd.f32 0.0, %v800
      %v802 = vpop.f32.mrb[0].mxu0
      %v803 = vpop.f32.mrb[0].mxu0
      %v804 = vadd.f32 0.0, %v803
      %v805 = vpop.f32.mrb[0].mxu0
      %806 = vmatprep.mubr.bf16.mxu0 %v632
      %807 = vmatmul.mubr.bf16.gmra.mrb[0].mxu0 %v469
      %v808 = vpop.f32.mrb[0].mxu0
      %v809 = vadd.f32 0.0, %v808
      %v810 = vpop.f32.mrb[0].mxu0
      %v811 = vpop.f32.mrb[0].mxu0
      %v812 = vadd.f32 0.0, %v811
      %v813 = vpop.f32.mrb[0].mxu0
      %814 = vmatprep.mubr.bf16.mxu0 %v635
      %815 = vmatmul.mubr.bf16.gmra.mrb[0].mxu0 %v471
      %v816 = vpop.f32.mrb[0].mxu0
      %v817 = vadd.f32 0.0, %v816
      %v818 = vpop.f32.mrb[0].mxu0
      %v819 = vpop.f32.mrb[0].mxu0
      %v820 = vadd.f32 0.0, %v819
      %v821 = vpop.f32.mrb[0].mxu0
      %822 = vmatprep.mubr.bf16.mxu0 %v638
      %823 = vmatmul.mubr.bf16.gmra.mrb[0].mxu0 %v473
      %v824 = vpop.f32.mrb[0].mxu0
      %v825 = vadd.f32 0.0, %v824
      %v826 = vpop.f32.mrb[0].mxu0
      %v827 = vpop.f32.mrb[0].mxu0
      %v828 = vadd.f32 0.0, %v827
      %v829 = vpop.f32.mrb[0].mxu0
      %830 = vmatprep.mubr.bf16.mxu0 %v641
      %831 = vmatmul.mubr.bf16.gmra.mrb[0].mxu0 %v475
      %v832 = vpop.f32.mrb[0].mxu0
      %v833 = vadd.f32 0.0, %v832
      %v834 = vpop.f32.mrb[0].mxu0
      %v835 = vpop.f32.mrb[0].mxu0
      %v836 = vadd.f32 0.0, %v835
      %v837 = vpop.f32.mrb[0].mxu0
      %838 = vmatprep.mubr.bf16.mxu0 %v644
      %839 = vmatmul.mubr.bf16.gmra.mrb[0].mxu0 %v477
      %v840 = vpop.f32.mrb[0].mxu0
      %v841 = vadd.f32 0.0, %v840
      %v842 = vpop.f32.mrb[0].mxu0
      %v843 = vpop.f32.mrb[0].mxu0
      %v844 = vadd.f32 0.0, %v843
      %v845 = vpop.f32.mrb[0].mxu0
      %846 = vmatprep.mubr.bf16.mxu0 %v647
      %847 = vmatmul.mubr.bf16.gmra.mrb[0].mxu0 %v479
      %v848 = vpop.f32.mrb[0].mxu0
      %v849 = vadd.f32 0.0, %v848
      %v850 = vpop.f32.mrb[0].mxu0
      %v851 = vpop.f32.mrb[0].mxu0
      %v852 = vadd.f32 0.0, %v851
      %v853 = vpop.f32.mrb[0].mxu0
      %854 = vmatprep.mubr.bf16.mxu0 %v650
      %855 = vmatmul.mubr.bf16.gmra.mrb[0].mxu0 %v481
      %v856 = vpop.f32.mrb[0].mxu0
      %v857 = vadd.f32 0.0, %v856
      %v858 = vpop.f32.mrb[0].mxu0
      %v859 = vpop.f32.mrb[0].mxu0
      %v860 = vadd.f32 0.0, %v859
      %v861 = vpop.f32.mrb[0].mxu0
      %862 = vmatprep.mubr.bf16.mxu0 %v653
      %863 = vmatmul.mubr.bf16.gmra.mrb[0].mxu0 %v483
      %v864 = vpop.f32.mrb[0].mxu0
      %v865 = vadd.f32 0.0, %v864
      %v866 = vpop.f32.mrb[0].mxu0
      %v867 = vpop.f32.mrb[0].mxu0
      %v868 = vadd.f32 0.0, %v867
      %v869 = vpop.f32.mrb[0].mxu0
      %870 = vmatprep.mubr.bf16.mxu0 %v656
      %871 = vmatmul.mubr.bf16.gmra.mrb[0].mxu0 %v485
      %v872 = vpop.f32.mrb[0].mxu0
      %v873 = vadd.f32 0.0, %v872
      %v874 = vpop.f32.mrb[0].mxu0
      %v875 = vpop.f32.mrb[0].mxu0
      %v876 = vadd.f32 0.0, %v875
      %v877 = vpop.f32.mrb[0].mxu0
      %878 = vmatprep.mubr.bf16.mxu0 %v659
      %879 = vmatmul.mubr.bf16.gmra.mrb[0].mxu0 %v487
      %v880 = vpop.f32.mrb[0].mxu0
      %v881 = vadd.f32 0.0, %v880
      %v882 = vpop.f32.mrb[0].mxu0
      %v883 = vpop.f32.mrb[0].mxu0
      %v884 = vadd.f32 0.0, %v883
      %v885 = vpop.f32.mrb[0].mxu0
      %886 = vmatprep.mubr.bf16.mxu0 %v662
      %887 = vmatmul.mubr.bf16.gmra.mrb[0].mxu0 %v489
      %v888 = vpop.f32.mrb[0].mxu0
      %v889 = vadd.f32 0.0, %v888
      %v890 = vpop.f32.mrb[0].mxu0
      %v891 = vpop.f32.mrb[0].mxu0
      %v892 = vadd.f32 0.0, %v891
      %v893 = vpop.f32.mrb[0].mxu0
      %894 = vmatprep.mubr.bf16.mxu0 %v665
      %895 = vmatmul.mubr.bf16.gmra.mrb[0].mxu0 %v491
      %v896 = vpop.f32.mrb[0].mxu0
      %v897 = vadd.f32 0.0, %v896
      %v898 = vpop.f32.mrb[0].mxu0
      %v899 = vpop.f32.mrb[0].mxu0
      %v900 = vadd.f32 0.0, %v899
      %v901 = vpop.f32.mrb[0].mxu0
      %902 = vmatprep.mubr.bf16.mxu0 %v668
      %903 = vmatmul.mubr.bf16.gmra.mrb[0].mxu0 %v493
      %v904 = vpop.f32.mrb[0].mxu0
      %v905 = vadd.f32 0.0, %v904
      %v906 = vpop.f32.mrb[0].mxu0
      %v907 = vpop.f32.mrb[0].mxu0
      %v908 = vadd.f32 0.0, %v907
      %v909 = vpop.f32.mrb[0].mxu0
      %910 = vmatprep.mubr.bf16.mxu0 %v671
      %911 = vmatmul.mubr.bf16.gmra.mrb[0].mxu0 %v495
      %v912 = vpop.f32.mrb[0].mxu0
      %v913 = vadd.f32 0.0, %v912
      %v914 = vpop.f32.mrb[0].mxu0
      %v915 = vpop.f32.mrb[0].mxu0
      %v916 = vadd.f32 0.0, %v915
      %v917 = vpop.f32.mrb[0].mxu0
      %918 = vmatprep.mubr.bf16.mxu0 %v674
      %919 = vmatmul.mubr.bf16.gmra.mrb[0].mxu0 %v497
      %v920 = vpop.f32.mrb[0].mxu0
      %v921 = vadd.f32 0.0, %v920
      %v922 = vpop.f32.mrb[0].mxu0
      %v923 = vpop.f32.mrb[0].mxu0
      %v924 = vadd.f32 0.0, %v923
      %v925 = vpop.f32.mrb[0].mxu0
      %926 = vmatprep.mubr.bf16.mxu0 %v677
      %927 = vmatmul.mubr.bf16.gmra.mrb[0].mxu0 %v499
      %v928 = vpop.f32.mrb[0].mxu0
      %v929 = vadd.f32 0.0, %v928
      %v930 = vpop.f32.mrb[0].mxu0
      %v931 = vpop.f32.mrb[0].mxu0
      %v932 = vadd.f32 0.0, %v931
      %v933 = vpop.f32.mrb[0].mxu0
      %934 = vmatprep.mubr.bf16.mxu0 %v680
      %935 = vmatmul.mubr.bf16.gmra.mrb[0].mxu0 %v501
      %v936 = vpop.f32.mrb[0].mxu0
      %v937 = vadd.f32 0.0, %v936
      %v938 = vpop.f32.mrb[0].mxu0
      %v939 = vpop.f32.mrb[0].mxu0
      %v940 = vadd.f32 0.0, %v939
      %v941 = vpop.f32.mrb[0].mxu0
      %942 = vmatprep.mubr.bf16.mxu0 %v683
      %943 = vmatmul.mubr.bf16.gmra.mrb[0].mxu0 %v503
      %v944 = vpop.f32.mrb[0].mxu0
      %v945 = vadd.f32 0.0, %v944
      %v946 = vpop.f32.mrb[0].mxu0
      %v947 = vpop.f32.mrb[0].mxu0
      %v948 = vadd.f32 0.0, %v947
      %v949 = vpop.f32.mrb[0].mxu0
      %950 = vmatprep.mubr.bf16.mxu0 %v686
      %951 = vmatmul.mubr.bf16.gmra.mrb[0].mxu0 %v505
      %v952 = vpop.f32.mrb[0].mxu0
      %v953 = vadd.f32 0.0, %v952
      %v954 = vpop.f32.mrb[0].mxu0
      %v955 = vpop.f32.mrb[0].mxu0
      %v956 = vadd.f32 0.0, %v955
      %v957 = vpop.f32.mrb[0].mxu0
      %958 = vmatprep.mubr.bf16.mxu0 %v689
      %959 = vmatmul.mubr.bf16.gmra.mrb[0].mxu0 %v507
      %v960 = vpop.f32.mrb[0].mxu0
      %v961 = vadd.f32 0.0, %v960
      %v962 = vpop.f32.mrb[0].mxu0
      %v963 = vpop.f32.mrb[0].mxu0
      %v964 = vadd.f32 0.0, %v963
      %v965 = vpop.f32.mrb[0].mxu0
      %966 = vmatprep.mubr.bf16.mxu0 %v692
      %967 = vmatmul.mubr.bf16.gmra.mrb[0].mxu0 %v509
      %v968 = vpop.f32.mrb[0].mxu0
      %v969 = vadd.f32 0.0, %v968
      %v970 = vpop.f32.mrb[0].mxu0
      %v971 = vpop.f32.mrb[0].mxu0
      %v972 = vadd.f32 0.0, %v971
      %v973 = vpop.f32.mrb[0].mxu0
      %974 = vmatprep.mubr.bf16.mxu0 %v695
      %975 = vmatmul.mubr.bf16.gmra.mrb[0].mxu0 %v511
      %v976 = vpop.f32.mrb[0].mxu0
      %v977 = vadd.f32 0.0, %v976
      %v978 = vpop.f32.mrb[0].mxu0
      %v979 = vpop.f32.mrb[0].mxu0
      %v980 = vadd.f32 0.0, %v979
      %v981 = vpop.f32.mrb[0].mxu0
      %982 = vmatprep.mubr.bf16.mxu0 %v698
      %983 = vmatmul.mubr.bf16.gmra.mrb[0].mxu0 %v513
      %v984 = vpop.f32.mrb[0].mxu0
      %v985 = vadd.f32 0.0, %v984
      %v986 = vpop.f32.mrb[0].mxu0
      %v987 = vpop.f32.mrb[0].mxu0
      %v988 = vadd.f32 0.0, %v987
      %v989 = vpop.f32.mrb[0].mxu0
      %990 = vmatprep.mubr.bf16.mxu0 %v701
      %991 = vmatmul.mubr.bf16.gmra.mrb[0].mxu0 %v515
      %v992 = vpop.f32.mrb[0].mxu0
      %v993 = vadd.f32 0.0, %v992
      %v994 = vpop.f32.mrb[0].mxu0
      %v995 = vpop.f32.mrb[0].mxu0
      %v996 = vadd.f32 0.0, %v995
      %v997 = vpop.f32.mrb[0].mxu0
      %998 = vdwg.mxu0
      %v999 = vld [vmem:[%s2] sm:$0x1]
      %v1000 = vlaneseq
      %v1001 = vshrl.u32 %v1000, 7
      %v1002 = vsub.s32 0, %v1001
      %v1003 = vrot.slane %v999, %v1002
      %v1004 = vmul.f32 %v745, %v1003
      %v1005 = vmul.f32 %v748, %v1003
      %v1006 = vmul.f32 %v753, %v1003
      %v1007 = vmul.f32 %v756, %v1003
      %v1008 = vmul.f32 %v761, %v1003
      %v1009 = vmul.f32 %v764, %v1003
      %v1010 = vmul.f32 %v769, %v1003
      %v1011 = vmul.f32 %v772, %v1003
      %v1012 = vmul.f32 %v777, %v1003
      %v1013 = vmul.f32 %v780, %v1003
      %v1014 = vmul.f32 %v785, %v1003
      %v1015 = vmul.f32 %v788, %v1003
      %v1016 = vmul.f32 %v793, %v1003
      %v1017 = vmul.f32 %v796, %v1003
      %v1018 = vmul.f32 %v801, %v1003
      %v1019 = vmul.f32 %v804, %v1003
      %v1020 = vmul.f32 %v809, %v1003
      %v1021 = vmul.f32 %v812, %v1003
      %v1022 = vmul.f32 %v817, %v1003
      %v1023 = vmul.f32 %v820, %v1003
      %v1024 = vmul.f32 %v825, %v1003
      %v1025 = vmul.f32 %v828, %v1003
      %v1026 = vmul.f32 %v833, %v1003
      %v1027 = vmul.f32 %v836, %v1003
      %v1028 = vmul.f32 %v841, %v1003
      %v1029 = vmul.f32 %v844, %v1003
      %v1030 = vmul.f32 %v849, %v1003
      %v1031 = vmul.f32 %v852, %v1003
      %v1032 = vmul.f32 %v857, %v1003
      %v1033 = vmul.f32 %v860, %v1003
      %v1034 = vmul.f32 %v865, %v1003
      %v1035 = vmul.f32 %v868, %v1003
      %v1036 = vmul.f32 %v873, %v1003
      %v1037 = vmul.f32 %v876, %v1003
      %v1038 = vmul.f32 %v881, %v1003
      %v1039 = vmul.f32 %v884, %v1003
      %v1040 = vmul.f32 %v889, %v1003
      %v1041 = vmul.f32 %v892, %v1003
      %v1042 = vmul.f32 %v897, %v1003
      %v1043 = vmul.f32 %v900, %v1003
      %v1044 = vmul.f32 %v905, %v1003
      %v1045 = vmul.f32 %v908, %v1003
      %v1046 = vmul.f32 %v913, %v1003
      %v1047 = vmul.f32 %v916, %v1003
      %v1048 = vmul.f32 %v921, %v1003
      %v1049 = vmul.f32 %v924, %v1003
      %v1050 = vmul.f32 %v929, %v1003
      %v1051 = vmul.f32 %v932, %v1003
      %v1052 = vmul.f32 %v937, %v1003
      %v1053 = vmul.f32 %v940, %v1003
      %v1054 = vmul.f32 %v945, %v1003
      %v1055 = vmul.f32 %v948, %v1003
      %v1056 = vmul.f32 %v953, %v1003
      %v1057 = vmul.f32 %v956, %v1003
      %v1058 = vmul.f32 %v961, %v1003
      %v1059 = vmul.f32 %v964, %v1003
      %v1060 = vmul.f32 %v969, %v1003
      %v1061 = vmul.f32 %v972, %v1003
      %v1062 = vmul.f32 %v977, %v1003
      %v1063 = vmul.f32 %v980, %v1003
      %v1064 = vmul.f32 %v985, %v1003
      %v1065 = vmul.f32 %v988, %v1003
      %v1066 = vmul.f32 %v993, %v1003
      %v1067 = vmul.f32 %v996, %v1003
      %v1068 = vld [vmem:[%s2 + $0x1] sm:$0x1]
      %v1069 = vlaneseq
      %v1070 = vshrl.u32 %v1069, 7
      %v1071 = vsub.s32 0, %v1070
      %v1072 = vrot.slane %v1068, %v1071
      %v1073 = vadd.f32 %v1004, %v1072
      %v1074 = vadd.f32 %v1005, %v1072
      %v1075 = vadd.f32 %v1006, %v1072
      %v1076 = vadd.f32 %v1007, %v1072
      %v1077 = vadd.f32 %v1008, %v1072
      %v1078 = vadd.f32 %v1009, %v1072
      %v1079 = vadd.f32 %v1010, %v1072
      %v1080 = vadd.f32 %v1011, %v1072
      %v1081 = vadd.f32 %v1012, %v1072
      %v1082 = vadd.f32 %v1013, %v1072
      %v1083 = vadd.f32 %v1014, %v1072
      %v1084 = vadd.f32 %v1015, %v1072
      %v1085 = vadd.f32 %v1016, %v1072
      %v1086 = vadd.f32 %v1017, %v1072
      %v1087 = vadd.f32 %v1018, %v1072
      %v1088 = vadd.f32 %v1019, %v1072
      %v1089 = vadd.f32 %v1020, %v1072
      %v1090 = vadd.f32 %v1021, %v1072
      %v1091 = vadd.f32 %v1022, %v1072
      %v1092 = vadd.f32 %v1023, %v1072
      %v1093 = vadd.f32 %v1024, %v1072
      %v1094 = vadd.f32 %v1025, %v1072
      %v1095 = vadd.f32 %v1026, %v1072
      %v1096 = vadd.f32 %v1027, %v1072
      %v1097 = vadd.f32 %v1028, %v1072
      %v1098 = vadd.f32 %v1029, %v1072
      %v1099 = vadd.f32 %v1030, %v1072
      %v1100 = vadd.f32 %v1031, %v1072
      %v1101 = vadd.f32 %v1032, %v1072
      %v1102 = vadd.f32 %v1033, %v1072
      %v1103 = vadd.f32 %v1034, %v1072
      %v1104 = vadd.f32 %v1035, %v1072
      %v1105 = vadd.f32 %v1036, %v1072
      %v1106 = vadd.f32 %v1037, %v1072
      %v1107 = vadd.f32 %v1038, %v1072
      %v1108 = vadd.f32 %v1039, %v1072
      %v1109 = vadd.f32 %v1040, %v1072
      %v1110 = vadd.f32 %v1041, %v1072
      %v1111 = vadd.f32 %v1042, %v1072
      %v1112 = vadd.f32 %v1043, %v1072
      %v1113 = vadd.f32 %v1044, %v1072
      %v1114 = vadd.f32 %v1045, %v1072
      %v1115 = vadd.f32 %v1046, %v1072
      %v1116 = vadd.f32 %v1047, %v1072
      %v1117 = vadd.f32 %v1048, %v1072
      %v1118 = vadd.f32 %v1049, %v1072
      %v1119 = vadd.f32 %v1050, %v1072
      %v1120 = vadd.f32 %v1051, %v1072
      %v1121 = vadd.f32 %v1052, %v1072
      %v1122 = vadd.f32 %v1053, %v1072
      %v1123 = vadd.f32 %v1054, %v1072
      %v1124 = vadd.f32 %v1055, %v1072
      %v1125 = vadd.f32 %v1056, %v1072
      %v1126 = vadd.f32 %v1057, %v1072
      %v1127 = vadd.f32 %v1058, %v1072
      %v1128 = vadd.f32 %v1059, %v1072
      %v1129 = vadd.f32 %v1060, %v1072
      %v1130 = vadd.f32 %v1061, %v1072
      %v1131 = vadd.f32 %v1062, %v1072
      %v1132 = vadd.f32 %v1063, %v1072
      %v1133 = vadd.f32 %v1064, %v1072
      %v1134 = vadd.f32 %v1065, %v1072
      %v1135 = vadd.f32 %v1066, %v1072
      %v1136 = vadd.f32 %v1067, %v1072
      %v1137 = vmax.f32 %v1073, 0.0
      %v1138 = vmax.f32 %v1074, 0.0
      %v1139 = vmax.f32 %v1075, 0.0
      %v1140 = vmax.f32 %v1076, 0.0
      %v1141 = vmax.f32 %v1077, 0.0
      %v1142 = vmax.f32 %v1078, 0.0
      %v1143 = vmax.f32 %v1079, 0.0
      %v1144 = vmax.f32 %v1080, 0.0
      %v1145 = vmax.f32 %v1081, 0.0
      %v1146 = vmax.f32 %v1082, 0.0
      %v1147 = vmax.f32 %v1083, 0.0
      %v1148 = vmax.f32 %v1084, 0.0
      %v1149 = vmax.f32 %v1085, 0.0
      %v1150 = vmax.f32 %v1086, 0.0
      %v1151 = vmax.f32 %v1087, 0.0
      %v1152 = vmax.f32 %v1088, 0.0
      %v1153 = vmax.f32 %v1089, 0.0
      %v1154 = vmax.f32 %v1090, 0.0
      %v1155 = vmax.f32 %v1091, 0.0
      %v1156 = vmax.f32 %v1092, 0.0
      %v1157 = vmax.f32 %v1093, 0.0
      %v1158 = vmax.f32 %v1094, 0.0
      %v1159 = vmax.f32 %v1095, 0.0
      %v1160 = vmax.f32 %v1096, 0.0
      %v1161 = vmax.f32 %v1097, 0.0
      %v1162 = vmax.f32 %v1098, 0.0
      %v1163 = vmax.f32 %v1099, 0.0
      %v1164 = vmax.f32 %v1100, 0.0
      %v1165 = vmax.f32 %v1101, 0.0
      %v1166 = vmax.f32 %v1102, 0.0
      %v1167 = vmax.f32 %v1103, 0.0
      %v1168 = vmax.f32 %v1104, 0.0
      %v1169 = vmax.f32 %v1105, 0.0
      %v1170 = vmax.f32 %v1106, 0.0
      %v1171 = vmax.f32 %v1107, 0.0
      %v1172 = vmax.f32 %v1108, 0.0
      %v1173 = vmax.f32 %v1109, 0.0
      %v1174 = vmax.f32 %v1110, 0.0
      %v1175 = vmax.f32 %v1111, 0.0
      %v1176 = vmax.f32 %v1112, 0.0
      %v1177 = vmax.f32 %v1113, 0.0
      %v1178 = vmax.f32 %v1114, 0.0
      %v1179 = vmax.f32 %v1115, 0.0
      %v1180 = vmax.f32 %v1116, 0.0
      %v1181 = vmax.f32 %v1117, 0.0
      %v1182 = vmax.f32 %v1118, 0.0
      %v1183 = vmax.f32 %v1119, 0.0
      %v1184 = vmax.f32 %v1120, 0.0
      %v1185 = vmax.f32 %v1121, 0.0
      %v1186 = vmax.f32 %v1122, 0.0
      %v1187 = vmax.f32 %v1123, 0.0
      %v1188 = vmax.f32 %v1124, 0.0
      %v1189 = vmax.f32 %v1125, 0.0
      %v1190 = vmax.f32 %v1126, 0.0
      %v1191 = vmax.f32 %v1127, 0.0
      %v1192 = vmax.f32 %v1128, 0.0
      %v1193 = vmax.f32 %v1129, 0.0
      %v1194 = vmax.f32 %v1130, 0.0
      %v1195 = vmax.f32 %v1131, 0.0
      %v1196 = vmax.f32 %v1132, 0.0
      %v1197 = vmax.f32 %v1133, 0.0
      %v1198 = vmax.f32 %v1134, 0.0
      %v1199 = vmax.f32 %v1135, 0.0
      %v1200 = vmax.f32 %v1136, 0.0
      %v1201 = vpack.c.bf16 %v1138, %v1137
      %v1202 = vpack.c.bf16 %v1140, %v1139
      %v1203 = vpack.c.bf16 %v1142, %v1141
      %v1204 = vpack.c.bf16 %v1144, %v1143
      %v1205 = vpack.c.bf16 %v1146, %v1145
      %v1206 = vpack.c.bf16 %v1148, %v1147
      %v1207 = vpack.c.bf16 %v1150, %v1149
      %v1208 = vpack.c.bf16 %v1152, %v1151
      %v1209 = vpack.c.bf16 %v1154, %v1153
      %v1210 = vpack.c.bf16 %v1156, %v1155
      %v1211 = vpack.c.bf16 %v1158, %v1157
      %v1212 = vpack.c.bf16 %v1160, %v1159
      %v1213 = vpack.c.bf16 %v1162, %v1161
      %v1214 = vpack.c.bf16 %v1164, %v1163
      %v1215 = vpack.c.bf16 %v1166, %v1165
      %v1216 = vpack.c.bf16 %v1168, %v1167
      %v1217 = vpack.c.bf16 %v1170, %v1169
      %v1218 = vpack.c.bf16 %v1172, %v1171
      %v1219 = vpack.c.bf16 %v1174, %v1173
      %v1220 = vpack.c.bf16 %v1176, %v1175
      %v1221 = vpack.c.bf16 %v1178, %v1177
      %v1222 = vpack.c.bf16 %v1180, %v1179
      %v1223 = vpack.c.bf16 %v1182, %v1181
      %v1224 = vpack.c.bf16 %v1184, %v1183
      %v1225 = vpack.c.bf16 %v1186, %v1185
      %v1226 = vpack.c.bf16 %v1188, %v1187
      %v1227 = vpack.c.bf16 %v1190, %v1189
      %v1228 = vpack.c.bf16 %v1192, %v1191
      %v1229 = vpack.c.bf16 %v1194, %v1193
      %v1230 = vpack.c.bf16 %v1196, %v1195
      %v1231 = vpack.c.bf16 %v1198, %v1197
      %v1232 = vpack.c.bf16 %v1200, %v1199
      %v1265 = vunpack.c.l.b16 %v1201
      %v1266 = vunpack.c.h.b16 %v1201
      %v1267 = vunpack.c.l.b16 %v1202
      %v1268 = vunpack.c.h.b16 %v1202
      %v1269 = vunpack.c.l.b16 %v1203
      %v1270 = vunpack.c.h.b16 %v1203
      %v1271 = vunpack.c.l.b16 %v1204
      %v1272 = vunpack.c.h.b16 %v1204
      %v1273 = vunpack.c.l.b16 %v1205
      %v1274 = vunpack.c.h.b16 %v1205
      %v1275 = vunpack.c.l.b16 %v1206
      %v1276 = vunpack.c.h.b16 %v1206
      %v1277 = vunpack.c.l.b16 %v1207
      %v1278 = vunpack.c.h.b16 %v1207
      %v1279 = vunpack.c.l.b16 %v1208
      %v1280 = vunpack.c.h.b16 %v1208
      %v1281 = vunpack.c.l.b16 %v1209
      %v1282 = vunpack.c.h.b16 %v1209
      %v1283 = vunpack.c.l.b16 %v1210
      %v1284 = vunpack.c.h.b16 %v1210
      %v1285 = vunpack.c.l.b16 %v1211
      %v1286 = vunpack.c.h.b16 %v1211
      %v1287 = vunpack.c.l.b16 %v1212
      %v1288 = vunpack.c.h.b16 %v1212
      %v1289 = vunpack.c.l.b16 %v1213
      %v1290 = vunpack.c.h.b16 %v1213
      %v1291 = vunpack.c.l.b16 %v1214
      %v1292 = vunpack.c.h.b16 %v1214
      %v1293 = vunpack.c.l.b16 %v1215
      %v1294 = vunpack.c.h.b16 %v1215
      %v1295 = vunpack.c.l.b16 %v1216
      %v1296 = vunpack.c.h.b16 %v1216
      %v1297 = vunpack.c.l.b16 %v1217
      %v1298 = vunpack.c.h.b16 %v1217
      %v1299 = vunpack.c.l.b16 %v1218
      %v1300 = vunpack.c.h.b16 %v1218
      %v1301 = vunpack.c.l.b16 %v1219
      %v1302 = vunpack.c.h.b16 %v1219
      %v1303 = vunpack.c.l.b16 %v1220
      %v1304 = vunpack.c.h.b16 %v1220
      %v1305 = vunpack.c.l.b16 %v1221
      %v1306 = vunpack.c.h.b16 %v1221
      %v1307 = vunpack.c.l.b16 %v1222
      %v1308 = vunpack.c.h.b16 %v1222
      %v1309 = vunpack.c.l.b16 %v1223
      %v1310 = vunpack.c.h.b16 %v1223
      %v1311 = vunpack.c.l.b16 %v1224
      %v1312 = vunpack.c.h.b16 %v1224
      %v1313 = vunpack.c.l.b16 %v1225
      %v1314 = vunpack.c.h.b16 %v1225
      %v1315 = vunpack.c.l.b16 %v1226
      %v1316 = vunpack.c.h.b16 %v1226
      %v1317 = vunpack.c.l.b16 %v1227
      %v1318 = vunpack.c.h.b16 %v1227
      %v1319 = vunpack.c.l.b16 %v1228
      %v1320 = vunpack.c.h.b16 %v1228
      %v1321 = vunpack.c.l.b16 %v1229
      %v1322 = vunpack.c.h.b16 %v1229
      %v1323 = vunpack.c.l.b16 %v1230
      %v1324 = vunpack.c.h.b16 %v1230
      %v1325 = vunpack.c.l.b16 %v1231
      %v1326 = vunpack.c.h.b16 %v1231
      %v1327 = vunpack.c.l.b16 %v1232
      %v1328 = vunpack.c.h.b16 %v1232
      %v1329 = vpack.c.b16 %v1265, %v1265
      %v1330 = vpack.c.b16 %v1266, %v1266
      %v1331 = vpack.c.b16 %v1267, %v1267
      %v1332 = vpack.c.b16 %v1268, %v1268
      %v1333 = vpack.c.b16 %v1269, %v1269
      %v1334 = vpack.c.b16 %v1270, %v1270
      %v1335 = vpack.c.b16 %v1271, %v1271
      %v1336 = vpack.c.b16 %v1272, %v1272
      %v1337 = vpack.c.b16 %v1273, %v1273
      %v1338 = vpack.c.b16 %v1274, %v1274
      %v1339 = vpack.c.b16 %v1275, %v1275
      %v1340 = vpack.c.b16 %v1276, %v1276
      %v1341 = vpack.c.b16 %v1277, %v1277
      %v1342 = vpack.c.b16 %v1278, %v1278
      %v1343 = vpack.c.b16 %v1279, %v1279
      %v1344 = vpack.c.b16 %v1280, %v1280
      %v1345 = vpack.c.b16 %v1281, %v1281
      %v1346 = vpack.c.b16 %v1282, %v1282
      %v1347 = vpack.c.b16 %v1283, %v1283
      %v1348 = vpack.c.b16 %v1284, %v1284
      %v1349 = vpack.c.b16 %v1285, %v1285
      %v1350 = vpack.c.b16 %v1286, %v1286
      %v1351 = vpack.c.b16 %v1287, %v1287
      %v1352 = vpack.c.b16 %v1288, %v1288
      %v1353 = vpack.c.b16 %v1289, %v1289
      %v1354 = vpack.c.b16 %v1290, %v1290
      %v1355 = vpack.c.b16 %v1291, %v1291
      %v1356 = vpack.c.b16 %v1292, %v1292
      %v1357 = vpack.c.b16 %v1293, %v1293
      %v1358 = vpack.c.b16 %v1294, %v1294
      %v1359 = vpack.c.b16 %v1295, %v1295
      %v1360 = vpack.c.b16 %v1296, %v1296
      %v1361 = vpack.c.b16 %v1297, %v1297
      %v1362 = vpack.c.b16 %v1298, %v1298
      %v1363 = vpack.c.b16 %v1299, %v1299
      %v1364 = vpack.c.b16 %v1300, %v1300
      %v1365 = vpack.c.b16 %v1301, %v1301
      %v1366 = vpack.c.b16 %v1302, %v1302
      %v1367 = vpack.c.b16 %v1303, %v1303
      %v1368 = vpack.c.b16 %v1304, %v1304
      %v1369 = vpack.c.b16 %v1305, %v1305
      %v1370 = vpack.c.b16 %v1306, %v1306
      %v1371 = vpack.c.b16 %v1307, %v1307
      %v1372 = vpack.c.b16 %v1308, %v1308
      %v1373 = vpack.c.b16 %v1309, %v1309
      %v1374 = vpack.c.b16 %v1310, %v1310
      %v1375 = vpack.c.b16 %v1311, %v1311
      %v1376 = vpack.c.b16 %v1312, %v1312
      %v1377 = vpack.c.b16 %v1313, %v1313
      %v1378 = vpack.c.b16 %v1314, %v1314
      %v1379 = vpack.c.b16 %v1315, %v1315
      %v1380 = vpack.c.b16 %v1316, %v1316
      %v1381 = vpack.c.b16 %v1317, %v1317
      %v1382 = vpack.c.b16 %v1318, %v1318
      %v1383 = vpack.c.b16 %v1319, %v1319
      %v1384 = vpack.c.b16 %v1320, %v1320
      %v1385 = vpack.c.b16 %v1321, %v1321
      %v1386 = vpack.c.b16 %v1322, %v1322
      %v1387 = vpack.c.b16 %v1323, %v1323
      %v1388 = vpack.c.b16 %v1324, %v1324
      %v1389 = vpack.c.b16 %v1325, %v1325
      %v1390 = vpack.c.b16 %v1326, %v1326
      %v1391 = vpack.c.b16 %v1327, %v1327
      %v1392 = vpack.c.b16 %v1328, %v1328
      %vm1457 = vcmask 60416
      %1458 = vst.msk [vmem:[%s175] sm:$0xf] %vm1457, %v1329
      %1459 = vst.msk [vmem:[%s175 + $0x4] sm:$0xf] %vm1457, %v1330
      %1460 = vst.msk [vmem:[%s175 + $0x8] sm:$0xf] %vm1457, %v1331
      %1461 = vst.msk [vmem:[%s175 + $0xc] sm:$0xf] %vm1457, %v1332
      %1462 = vst.msk [vmem:[%s175 + $0x10] sm:$0xf] %vm1457, %v1333
      %1463 = vst.msk [vmem:[%s175 + $0x14] sm:$0xf] %vm1457, %v1334
      %1464 = vst.msk [vmem:[%s175 + $0x18] sm:$0xf] %vm1457, %v1335
      %1465 = vst.msk [vmem:[%s175 + $0x1c] sm:$0xf] %vm1457, %v1336
      %1466 = vst.msk [vmem:[%s175 + $0x20] sm:$0xf] %vm1457, %v1337
      %1467 = vst.msk [vmem:[%s175 + $0x24] sm:$0xf] %vm1457, %v1338
      %1468 = vst.msk [vmem:[%s175 + $0x28] sm:$0xf] %vm1457, %v1339
      %1469 = vst.msk [vmem:[%s175 + $0x2c] sm:$0xf] %vm1457, %v1340
      %1470 = vst.msk [vmem:[%s175 + $0x30] sm:$0xf] %vm1457, %v1341
      %1471 = vst.msk [vmem:[%s175 + $0x34] sm:$0xf] %vm1457, %v1342
      %1472 = vst.msk [vmem:[%s175 + $0x38] sm:$0xf] %vm1457, %v1343
      %1473 = vst.msk [vmem:[%s175 + $0x3c] sm:$0xf] %vm1457, %v1344
      %1474 = vst.msk [vmem:[%s175 + $0x40] sm:$0xf] %vm1457, %v1345
      %1475 = vst.msk [vmem:[%s175 + $0x44] sm:$0xf] %vm1457, %v1346
      %1476 = vst.msk [vmem:[%s175 + $0x48] sm:$0xf] %vm1457, %v1347
      %1477 = vst.msk [vmem:[%s175 + $0x4c] sm:$0xf] %vm1457, %v1348
      %1478 = vst.msk [vmem:[%s175 + $0x50] sm:$0xf] %vm1457, %v1349
      %1479 = vst.msk [vmem:[%s175 + $0x54] sm:$0xf] %vm1457, %v1350
      %1480 = vst.msk [vmem:[%s175 + $0x58] sm:$0xf] %vm1457, %v1351
      %1481 = vst.msk [vmem:[%s175 + $0x5c] sm:$0xf] %vm1457, %v1352
      %1482 = vst.msk [vmem:[%s175 + $0x60] sm:$0xf] %vm1457, %v1353
      %1483 = vst.msk [vmem:[%s175 + $0x64] sm:$0xf] %vm1457, %v1354
      %1484 = vst.msk [vmem:[%s175 + $0x68] sm:$0xf] %vm1457, %v1355
      %1485 = vst.msk [vmem:[%s175 + $0x6c] sm:$0xf] %vm1457, %v1356
      %1486 = vst.msk [vmem:[%s175 + $0x70] sm:$0xf] %vm1457, %v1357
      %1487 = vst.msk [vmem:[%s175 + $0x74] sm:$0xf] %vm1457, %v1358
      %1488 = vst.msk [vmem:[%s175 + $0x78] sm:$0xf] %vm1457, %v1359
      %1489 = vst.msk [vmem:[%s175 + $0x7c] sm:$0xf] %vm1457, %v1360
      %1490 = vst.msk [vmem:[%s175 + $0x80] sm:$0xf] %vm1457, %v1361
      %1491 = vst.msk [vmem:[%s175 + $0x84] sm:$0xf] %vm1457, %v1362
      %1492 = vst.msk [vmem:[%s175 + $0x88] sm:$0xf] %vm1457, %v1363
      %1493 = vst.msk [vmem:[%s175 + $0x8c] sm:$0xf] %vm1457, %v1364
      %1494 = vst.msk [vmem:[%s175 + $0x90] sm:$0xf] %vm1457, %v1365
      %1495 = vst.msk [vmem:[%s175 + $0x94] sm:$0xf] %vm1457, %v1366
      %1496 = vst.msk [vmem:[%s175 + $0x98] sm:$0xf] %vm1457, %v1367
      %1497 = vst.msk [vmem:[%s175 + $0x9c] sm:$0xf] %vm1457, %v1368
      %1498 = vst.msk [vmem:[%s175 + $0xa0] sm:$0xf] %vm1457, %v1369
      %1499 = vst.msk [vmem:[%s175 + $0xa4] sm:$0xf] %vm1457, %v1370
      %1500 = vst.msk [vmem:[%s175 + $0xa8] sm:$0xf] %vm1457, %v1371
      %1501 = vst.msk [vmem:[%s175 + $0xac] sm:$0xf] %vm1457, %v1372
      %1502 = vst.msk [vmem:[%s175 + $0xb0] sm:$0xf] %vm1457, %v1373
      %1503 = vst.msk [vmem:[%s175 + $0xb4] sm:$0xf] %vm1457, %v1374
      %1504 = vst.msk [vmem:[%s175 + $0xb8] sm:$0xf] %vm1457, %v1375
      %1505 = vst.msk [vmem:[%s175 + $0xbc] sm:$0xf] %vm1457, %v1376
      %1506 = vst.msk [vmem:[%s175 + $0xc0] sm:$0xf] %vm1457, %v1377
      %1507 = vst.msk [vmem:[%s175 + $0xc4] sm:$0xf] %vm1457, %v1378
      %1508 = vst.msk [vmem:[%s175 + $0xc8] sm:$0xf] %vm1457, %v1379
      %1509 = vst.msk [vmem:[%s175 + $0xcc] sm:$0xf] %vm1457, %v1380
      %1510 = vst.msk [vmem:[%s175 + $0xd0] sm:$0xf] %vm1457, %v1381
      %1511 = vst.msk [vmem:[%s175 + $0xd4] sm:$0xf] %vm1457, %v1382
      %1512 = vst.msk [vmem:[%s175 + $0xd8] sm:$0xf] %vm1457, %v1383
      %1513 = vst.msk [vmem:[%s175 + $0xdc] sm:$0xf] %vm1457, %v1384
      %1514 = vst.msk [vmem:[%s175 + $0xe0] sm:$0xf] %vm1457, %v1385
      %1515 = vst.msk [vmem:[%s175 + $0xe4] sm:$0xf] %vm1457, %v1386
      %1516 = vst.msk [vmem:[%s175 + $0xe8] sm:$0xf] %vm1457, %v1387
      %1517 = vst.msk [vmem:[%s175 + $0xec] sm:$0xf] %vm1457, %v1388
      %1518 = vst.msk [vmem:[%s175 + $0xf0] sm:$0xf] %vm1457, %v1389
      %1519 = vst.msk [vmem:[%s175 + $0xf4] sm:$0xf] %vm1457, %v1390
      %1520 = vst.msk [vmem:[%s175 + $0xf8] sm:$0xf] %vm1457, %v1391
      %1521 = vst.msk [vmem:[%s175 + $0xfc] sm:$0xf] %vm1457, %v1392
      %s1522 = smul.u32 64, %s14
      %p1523 = scmp.lt.s32.totalorder %s1522, 255
      %s1524 = scalar_select %p1523, %s1522, 255
      %s1525 = smul.addr %s1524, 4
      %s1526 = scalar_lea.vmem %s3, %s1525
      // Predicated region
      $region33: #{matmul_affine.1} parent=31 // pred_check
        %p1527 = pneg %p100
      $region34: #{matmul_affine.1} parent=31 // pred_check_branch
        %1529 = sbr.rel (%p1527) target = $region36
      $region35: #{matmul_affine.1} parent=31 // pred_region
        %s1530 = smul.u32 64, %s14
      $region36: #{matmul_affine.1} parent=31 // pred_fallthru
        _
    $region32: #{matmul_affine.1} parent=5 // pred_fallthru
      _
    %p1531 = scmp.le.s32.totalorder 2, %s9
    // Predicated region
    $region37: #{matmul_affine.1} parent=5 // pred_check
      %p1532 = pneg %p1531
    $region38: #{matmul_affine.1} parent=5 // pred_check_branch
      %1534 = sbr.rel (%p1532) target = $region40
    $region39: #{matmul_affine.1} parent=5 // pred_region
      %s1535 = ssub.s32 %s9, 2
      // Predicated region
      $region41: #{matmul_affine.1} parent=39 // pred_check
        %p1536 = pneg %p106
      $region42: #{matmul_affine.1} parent=39 // pred_check_branch
        %1538 = sbr.rel (%p1536) target = $region44
      $region43: #{matmul_affine.1} parent=39 // pred_region
        %s1539 = smul.u32 64, %s15
        %p1540 = scmp.lt.s32.totalorder %s1539, 255
        %s1541 = scalar_select %p1540, %s1539, 255
        %s1542 = smul.addr %s1541, 4
        %s1543 = scalar_lea.vmem %s3, %s1542
      $region44: #{matmul_affine.1} parent=39 // pred_fallthru
        _
    $region40: #{matmul_affine.1} parent=5 // pred_fallthru
      _
  $region6: #{matmul_affine.1} parent=0 // loop_footer
    %s13 = sadd.s32 1, %s9
  $region7: #{matmul_affine.1} parent=0 // loop_footer_branch
    %8 = sbr.rel target = $region3
  $region8: #{matmul_affine.1} parent=0 // loop_exit
    _

</llo_original>
